<compile_context>
chip_gen: v6e
topology: v6e:2x2x1
jax: 0.10.0
libtpu: 0.0.40
codegen_flags: <defaults>
</compile_context>

<pallas_src>
import jax
import jax.numpy as jnp
from jax.experimental import pallas as pl
from jax.experimental.pallas import tpu as pltpu


def self_attention_kernel(xall_ref, xtile_ref, wq_ref, bq_ref, wkv_ref,
                          bkv_ref, gamma_ref, out_ref, attn_ref):
    # xall_ref : (1, N, C)   full (position-major) feature map for this batch
    # xtile_ref: (1, Tq, C)  query tile of the same feature map
    # wq_ref   : (C, Cq)     bq_ref: (1, Cq)
    # wkv_ref  : (C, Cq+C)   bkv_ref: (1, Cq+C)   (key | value stacked)
    # gamma_ref: (1,) in SMEM
    # out_ref  : (1, Tq, C)  attn_ref: (1, Tq, N)
    cq = wq_ref.shape[1]

    x_all = xall_ref[0]                                    # (N, C)  f32
    x_tile = xtile_ref[0]                                  # (Tq, C) f32

    # Fused key/value 1x1-conv projection over all N positions.
    kv = jnp.dot(x_all, wkv_ref[...],
                 preferred_element_type=jnp.float32) + bkv_ref[...]   # (N, Cq+C)
    k = kv[:, :cq]                                         # (N, Cq)
    v = kv[:, cq:]                                         # (N, C)

    # Query projection only for the current tile.
    q = jnp.dot(x_tile, wq_ref[...],
                preferred_element_type=jnp.float32) + bq_ref[...]     # (Tq, Cq)

    # energy[i, j] = <q_i, k_j>  -> (Tq, N). bf16 operands, f32 accumulation.
    energy = jax.lax.dot_general(
        q.astype(jnp.bfloat16), k.astype(jnp.bfloat16),
        (((1,), (1,)), ((), ())),
        preferred_element_type=jnp.float32)

    # Row-wise softmax over the key axis (numerically stable, exact: each
    # query tile sees the full key row).
    m = jnp.max(energy, axis=-1, keepdims=True)
    p = jnp.exp(energy - m)
    inv_denom = pl.reciprocal(jnp.sum(p, axis=-1, keepdims=True), approx=True)
    attn = p * inv_denom                                   # (Tq, N) f32
    attn_ref[0] = attn.astype(attn_ref.dtype)

    # out_tile[i, c] = sum_j attn[i, j] * v[j, c]  == (V @ A^T)^T for this tile.
    # Native MXU form: no NxN transpose anywhere.
    out_t = jnp.dot(attn.astype(jnp.bfloat16), v.astype(jnp.bfloat16),
                    preferred_element_type=jnp.float32)    # (Tq, C)

    gamma = gamma_ref[0]
    out_ref[0] = (gamma * out_t + x_tile).astype(out_ref.dtype)


def self_attention_pallas(x_nchw, wq, bq, wk, bk, wv, bv, gamma,
                          *, tq=256, attn_dtype=jnp.float32):
    """x_nchw: (B, C, W, H) f32. Returns (out (B,C,W,H) f32, attention (B,N,N))."""
    B, C, W, H = x_nchw.shape
    N = W * H
    Cq = wq.shape[0]

    tq = min(tq, N)
    assert N % tq == 0, "W*H must be divisible by the query tile size"
    assert tq % 8 == 0, "query tile must be sublane-aligned"

    # Position-major layout: x (B, N, C); 1x1 convs become x @ W^T.
    x_pm = x_nchw.reshape(B, C, N).transpose(0, 2, 1)       # (B, N, C)
    wq_t = wq.T                                             # (C, Cq)
    wkv_t = jnp.concatenate([wk, wv], axis=0).T             # (C, Cq + C)
    bq_r = bq.reshape(1, Cq)
    bkv_r = jnp.concatenate([bk, bv]).reshape(1, Cq + C)
    gamma_s = gamma.reshape(1).astype(jnp.float32)

    grid = (B, N // tq)

    out_pm, attn = pl.pallas_call(
        self_attention_kernel,
        out_shape=(jax.ShapeDtypeStruct((B, N, C), x_nchw.dtype),
                   jax.ShapeDtypeStruct((B, N, N), attn_dtype)),
        grid=grid,
        in_specs=[
            pl.BlockSpec((1, N, C), lambda b, qi: (b, 0, 0)),    # x, full (k/v)
            pl.BlockSpec((1, tq, C), lambda b, qi: (b, qi, 0)),  # x, query tile
            pl.BlockSpec((C, Cq), lambda b, qi: (0, 0)),         # Wq^T
            pl.BlockSpec((1, Cq), lambda b, qi: (0, 0)),         # bq
            pl.BlockSpec((C, Cq + C), lambda b, qi: (0, 0)),     # [Wk|Wv]^T
            pl.BlockSpec((1, Cq + C), lambda b, qi: (0, 0)),     # [bk|bv]
            pl.BlockSpec(memory_space=pltpu.MemorySpace.SMEM),   # gamma scalar
        ],
        out_specs=(pl.BlockSpec((1, tq, C), lambda b, qi: (b, qi, 0)),
                   pl.BlockSpec((1, tq, N), lambda b, qi: (b, qi, 0))),
        compiler_params=pltpu.CompilerParams(
            dimension_semantics=("parallel", "parallel"),
            vmem_limit_bytes=48 * 1024 * 1024),   # headroom under v7x 64 MiB
    )(x_pm, x_pm, wq_t, bq_r, wkv_t, bkv_r, gamma_s)

    out = out_pm.transpose(0, 2, 1).reshape(B, C, W, H)
    return out, attn


def self_attention_ref(x_nchw, wq, bq, wk, bk, wv, bv, gamma):
    """Plain-JAX f32 reference mirroring the PyTorch forward (for validation)."""
    B, C, W, H = x_nchw.shape
    N = W * H
    x = x_nchw.reshape(B, C, N)
    q = jnp.einsum('oc,bcn->bon', wq, x) + bq[None, :, None]
    k = jnp.einsum('oc,bcn->bon', wk, x) + bk[None, :, None]
    v = jnp.einsum('oc,bcn->bon', wv, x) + bv[None, :, None]
    energy = jnp.einsum('bci,bcj->bij', q, k)
    attn = jax.nn.softmax(energy, axis=-1)
    out = jnp.einsum('bcj,bij->bci', v, attn)
    out = gamma.reshape(()) * out + x
    return out.reshape(B, C, W, H), attn


if __name__ == "__main__":
    # Small shapes consistent with the module (in_channels must be >= 8).
    B, C, W, H = 2, 16, 16, 16
    N = W * H
    Cq = C // 8

    key = jax.random.PRNGKey(0)
    k_x, k_wq, k_bq, k_wk, k_bk, k_wv, k_bv = jax.random.split(key, 7)

    x = jax.random.normal(k_x, (B, C, W, H), dtype=jnp.float32)

    # 1x1 conv weights stored as (out_channels, in_channels).
    wq = jax.random.normal(k_wq, (Cq, C), dtype=jnp.float32) * 0.1
    bq = jax.random.normal(k_bq, (Cq,), dtype=jnp.float32) * 0.1
    wk = jax.random.normal(k_wk, (Cq, C), dtype=jnp.float32) * 0.1
    bk = jax.random.normal(k_bk, (Cq,), dtype=jnp.float32) * 0.1
    wv = jax.random.normal(k_wv, (C, C), dtype=jnp.float32) * 0.1
    bv = jax.random.normal(k_bv, (C,), dtype=jnp.float32) * 0.1
    # Module inits gamma to 0; use a nonzero value here so the residual path
    # is actually exercised by the correctness check.
    gamma = jnp.full((1,), 0.5, dtype=jnp.float32)

    # tq=128 -> grid (B, 2): exercises the query tiling and the 2-D grid.
    out, attn = self_attention_pallas(x, wq, bq, wk, bk, wv, bv, gamma, tq=128)
    jax.block_until_ready(out)
    jax.block_until_ready(attn)

    out_ref, attn_ref = self_attention_ref(x, wq, bq, wk, bk, wv, bv, gamma)
    assert out.shape == (B, C, W, H) and attn.shape == (B, N, N)
    # bf16 MXU operands (f32 accumulation) vs. pure-f32 reference -> loose tol.
    assert jnp.allclose(attn, attn_ref, rtol=2e-2, atol=2e-2)
    assert jnp.allclose(out, out_ref, rtol=2e-2, atol=2e-2)

    print("KERNEL_OK")
</pallas_src>

<mosaic_0001>
module attributes {stable_mosaic.version = 11 : i64} {
  func.func @self_attention_kernel(%arg0: i32, %arg1: i32, %arg2: memref<1x256x16xf32, #tpu.memory_space<vmem>>, %arg3: memref<1x128x16xf32, #tpu.memory_space<vmem>>, %arg4: memref<16x2xf32, #tpu.memory_space<vmem>>, %arg5: memref<1x2xf32, #tpu.memory_space<vmem>>, %arg6: memref<16x18xf32, #tpu.memory_space<vmem>>, %arg7: memref<1x18xf32, #tpu.memory_space<vmem>>, %arg8: memref<1xf32, #tpu.memory_space<smem>>, %arg9: memref<1x128x16xf32, #tpu.memory_space<vmem>>, %arg10: memref<1x128x256xf32, #tpu.memory_space<vmem>>) attributes {dimension_semantics = [#tpu.dimension_semantics<parallel>, #tpu.dimension_semantics<parallel>], iteration_bounds = array<i64: 2, 2>, scalar_prefetch = 0 : i64, scratch_operands = 0 : i64, tpu.core_type = #tpu.core_type<tc>, window_params = [{transform_indices = @transform_0, window_bounds = array<i64: 1, 256, 16>}, {transform_indices = @transform_1, window_bounds = array<i64: 1, 128, 16>}, {pipeline_mode = #tpu.pipeline_mode<synchronous>, transform_indices = @transform_2, window_bounds = array<i64: 16, 2>}, {pipeline_mode = #tpu.pipeline_mode<synchronous>, transform_indices = @transform_3, window_bounds = array<i64: 1, 2>}, {pipeline_mode = #tpu.pipeline_mode<synchronous>, transform_indices = @transform_4, window_bounds = array<i64: 16, 18>}, {pipeline_mode = #tpu.pipeline_mode<synchronous>, transform_indices = @transform_5, window_bounds = array<i64: 1, 18>}, {transform_indices = @transform_6, window_bounds = array<i64: 1>}, {transform_indices = @transform_7, window_bounds = array<i64: 1, 128, 16>}, {transform_indices = @transform_8, window_bounds = array<i64: 1, 128, 256>}]} {
    %c0 = arith.constant 0 : index
    %c0_0 = arith.constant 0 : index
    %c0_1 = arith.constant 0 : index
    %0 = vector.load %arg2[%c0, %c0_0, %c0_1] : memref<1x256x16xf32, #tpu.memory_space<vmem>>, vector<1x256x16xf32>
    %1 = vector.shape_cast %0 : vector<1x256x16xf32> to vector<256x16xf32>
    %c0_2 = arith.constant 0 : index
    %c0_3 = arith.constant 0 : index
    %c0_4 = arith.constant 0 : index
    %2 = vector.load %arg3[%c0_2, %c0_3, %c0_4] : memref<1x128x16xf32, #tpu.memory_space<vmem>>, vector<1x128x16xf32>
    %3 = vector.shape_cast %2 : vector<1x128x16xf32> to vector<128x16xf32>
    %c0_5 = arith.constant 0 : index
    %c0_6 = arith.constant 0 : index
    %4 = vector.load %arg6[%c0_5, %c0_6] : memref<16x18xf32, #tpu.memory_space<vmem>>, vector<16x18xf32>
    %cst = arith.constant dense<0.000000e+00> : vector<256x18xf32>
    %5 = tpu.matmul %1, %4, %cst {dimension_numbers = #tpu.dot_dimension_numbers<[1], [0], [0], [1], [0, 0, 1, 1], [], []>} : vector<256x16xf32>, vector<16x18xf32>, vector<256x18xf32> -> vector<256x18xf32>
    %c0_7 = arith.constant 0 : index
    %c0_8 = arith.constant 0 : index
    %6 = vector.load %arg7[%c0_7, %c0_8] : memref<1x18xf32, #tpu.memory_space<vmem>>, vector<1x18xf32>
    %7 = vector.broadcast %6 : vector<1x18xf32> to vector<256x18xf32>
    %8 = arith.addf %5, %7 : vector<256x18xf32>
    %9 = vector.extract_strided_slice %8 {offsets = [0, 0], sizes = [256, 2], strides = [1, 1]} : vector<256x18xf32> to vector<256x2xf32>
    %10 = vector.extract_strided_slice %8 {offsets = [0, 2], sizes = [256, 16], strides = [1, 1]} : vector<256x18xf32> to vector<256x16xf32>
    %c0_9 = arith.constant 0 : index
    %c0_10 = arith.constant 0 : index
    %11 = vector.load %arg4[%c0_9, %c0_10] : memref<16x2xf32, #tpu.memory_space<vmem>>, vector<16x2xf32>
    %cst_11 = arith.constant dense<0.000000e+00> : vector<128x2xf32>
    %12 = tpu.matmul %3, %11, %cst_11 {dimension_numbers = #tpu.dot_dimension_numbers<[1], [0], [0], [1], [0, 0, 1, 1], [], []>} : vector<128x16xf32>, vector<16x2xf32>, vector<128x2xf32> -> vector<128x2xf32>
    %c0_12 = arith.constant 0 : index
    %c0_13 = arith.constant 0 : index
    %13 = vector.load %arg5[%c0_12, %c0_13] : memref<1x2xf32, #tpu.memory_space<vmem>>, vector<1x2xf32>
    %14 = vector.broadcast %13 : vector<1x2xf32> to vector<128x2xf32>
    %15 = arith.addf %12, %14 : vector<128x2xf32>
    %16 = arith.truncf %15 : vector<128x2xf32> to vector<128x2xbf16>
    %17 = arith.truncf %9 : vector<256x2xf32> to vector<256x2xbf16>
    %cst_14 = arith.constant dense<0.000000e+00> : vector<128x256xf32>
    %18 = tpu.matmul %16, %17, %cst_14 {dimension_numbers = #tpu.dot_dimension_numbers<[1], [1], [0], [0], [0, 0, 1, 0], [], []>} : vector<128x2xbf16>, vector<256x2xbf16>, vector<128x256xf32> -> vector<128x256xf32>
    %cst_15 = arith.constant dense<0xFF800000> : vector<128xf32>
    %19 = vector.multi_reduction <maximumf>, %18, %cst_15 [1] : vector<128x256xf32> to vector<128xf32>
    %20 = vector.shape_cast %19 : vector<128xf32> to vector<128x1xf32>
    %21 = vector.broadcast %20 : vector<128x1xf32> to vector<128x256xf32>
    %22 = arith.subf %18, %21 : vector<128x256xf32>
    %23 = math.exp %22 : vector<128x256xf32>
    %cst_16 = arith.constant dense<0.000000e+00> : vector<128xf32>
    %24 = vector.multi_reduction <add>, %23, %cst_16 [1] : vector<128x256xf32> to vector<128xf32>
    %25 = vector.shape_cast %24 : vector<128xf32> to vector<128x1xf32>
    %26 = tpu.reciprocal %25 {approx = true} : vector<128x1xf32> -> vector<128x1xf32>
    %27 = vector.broadcast %26 : vector<128x1xf32> to vector<128x256xf32>
    %28 = arith.mulf %23, %27 : vector<128x256xf32>
    %c0_17 = arith.constant 0 : index
    %c0_18 = arith.constant 0 : index
    %c0_19 = arith.constant 0 : index
    %29 = vector.load %arg10[%c0_17, %c0_18, %c0_19] : memref<1x128x256xf32, #tpu.memory_space<vmem>>, vector<1x128x256xf32>
    %30 = vector.shape_cast %29 : vector<1x128x256xf32> to vector<128x256xf32>
    %31 = vector.shape_cast %28 : vector<128x256xf32> to vector<1x128x256xf32>
    tpu.vector_store %arg10[%c0_17, %c0_18, %c0_19], %31 {strides = array<i32>} : memref<1x128x256xf32, #tpu.memory_space<vmem>>, vector<1x128x256xf32>,
    %32 = arith.truncf %28 : vector<128x256xf32> to vector<128x256xbf16>
    %33 = arith.truncf %10 : vector<256x16xf32> to vector<256x16xbf16>
    %cst_20 = arith.constant dense<0.000000e+00> : vector<128x16xf32>
    %34 = tpu.matmul %32, %33, %cst_20 {dimension_numbers = #tpu.dot_dimension_numbers<[1], [0], [0], [1], [0, 0, 1, 1], [], []>} : vector<128x256xbf16>, vector<256x16xbf16>, vector<128x16xf32> -> vector<128x16xf32>
    %c0_21 = arith.constant 0 : index
    %35 = memref.load %arg8[%c0_21] : memref<1xf32, #tpu.memory_space<smem>>
    %36 = vector.broadcast %35 : f32 to vector<128x16xf32>
    %37 = arith.mulf %36, %34 : vector<128x16xf32>
    %38 = arith.addf %37, %3 : vector<128x16xf32>
    %c0_22 = arith.constant 0 : index
    %c0_23 = arith.constant 0 : index
    %c0_24 = arith.constant 0 : index
    %39 = vector.load %arg9[%c0_22, %c0_23, %c0_24] : memref<1x128x16xf32, #tpu.memory_space<vmem>>, vector<1x128x16xf32>
    %40 = vector.shape_cast %39 : vector<1x128x16xf32> to vector<128x16xf32>
    %41 = vector.shape_cast %38 : vector<128x16xf32> to vector<1x128x16xf32>
    tpu.vector_store %arg9[%c0_22, %c0_23, %c0_24], %41 {strides = array<i32>} : memref<1x128x16xf32, #tpu.memory_space<vmem>>, vector<1x128x16xf32>,
    return
  }
  func.func @transform_0(%arg0: i32, %arg1: i32) -> (i32, i32, i32) {
    %c0_i32 = arith.constant 0 : i32
    %c0_i32_0 = arith.constant 0 : i32
    %c0_i32_1 = arith.constant 0 : i32
    return %arg0, %c0_i32, %c0_i32_0 : i32, i32, i32
  }
  func.func @transform_1(%arg0: i32, %arg1: i32) -> (i32, i32, i32) {
    %c0_i32 = arith.constant 0 : i32
    %c0_i32_0 = arith.constant 0 : i32
    return %arg0, %arg1, %c0_i32 : i32, i32, i32
  }
  func.func @transform_2(%arg0: i32, %arg1: i32) -> (i32, i32) {
    %c0_i32 = arith.constant 0 : i32
    %c0_i32_0 = arith.constant 0 : i32
    %c0_i32_1 = arith.constant 0 : i32
    return %c0_i32, %c0_i32_0 : i32, i32
  }
  func.func @transform_3(%arg0: i32, %arg1: i32) -> (i32, i32) {
    %c0_i32 = arith.constant 0 : i32
    %c0_i32_0 = arith.constant 0 : i32
    %c0_i32_1 = arith.constant 0 : i32
    return %c0_i32, %c0_i32_0 : i32, i32
  }
  func.func @transform_4(%arg0: i32, %arg1: i32) -> (i32, i32) {
    %c0_i32 = arith.constant 0 : i32
    %c0_i32_0 = arith.constant 0 : i32
    %c0_i32_1 = arith.constant 0 : i32
    return %c0_i32, %c0_i32_0 : i32, i32
  }
  func.func @transform_5(%arg0: i32, %arg1: i32) -> (i32, i32) {
    %c0_i32 = arith.constant 0 : i32
    %c0_i32_0 = arith.constant 0 : i32
    %c0_i32_1 = arith.constant 0 : i32
    return %c0_i32, %c0_i32_0 : i32, i32
  }
  func.func @transform_6(%arg0: i32, %arg1: i32) -> i32 {
    %c0_i32 = arith.constant 0 : i32
    %c0_i32_0 = arith.constant 0 : i32
    return %c0_i32 : i32
  }
  func.func @transform_7(%arg0: i32, %arg1: i32) -> (i32, i32, i32) {
    %c0_i32 = arith.constant 0 : i32
    %c0_i32_0 = arith.constant 0 : i32
    return %arg0, %arg1, %c0_i32 : i32, i32, i32
  }
  func.func @transform_8(%arg0: i32, %arg1: i32) -> (i32, i32, i32) {
    %c0_i32 = arith.constant 0 : i32
    %c0_i32_0 = arith.constant 0 : i32
    return %arg0, %arg1, %c0_i32 : i32, i32, i32
  }
}

</mosaic_0001>

<llo_original>
// kernel: tpu_custom_call.1
$region0: #{tpu_custom_call.1}
  #allocation0 [shape = 'u32[]', space=smem, size = 0x4, offset = 0x4, fixed_abs, tag = 'smem constant byte address 0x4 - core index']
  #allocation1 [shape = 'u32[144,128]{1,0:T(1,128)}', space=vmem, size = 0x12000, scoped, tag = 'internal scratch']
  #allocation2 [shape = 'f32[1]{0:T(128)S(6)}', space=smem, size = 0x200, scoped, tag = 'scoped memory for tpu_custom_call.1']
  %s0 = inlined_call_operand.vmem [shape: f32[2,256,16], index: 0, kind: input, shape index: {}]
  %s1 = inlined_call_operand.vmem [shape: f32[2,256,16], index: 1, kind: input, shape index: {}]
  %s2 = inlined_call_operand.vmem [shape: f32[16,2], index: 2, kind: input, shape index: {}]
  %s3 = inlined_call_operand.vmem [shape: f32[1,2], index: 3, kind: input, shape index: {}]
  %s4 = inlined_call_operand.vmem [shape: f32[16,18], index: 4, kind: input, shape index: {}]
  %s5 = inlined_call_operand.vmem [shape: f32[1,18], index: 5, kind: input, shape index: {}]
  %s6 = inlined_call_operand.<no memory space> [shape: f32[1], index: 6, kind: input, shape index: {}]
  %s7 = inlined_call_operand.vmem [shape: f32[2,256,16], index: 7, kind: output, shape index: {0}]
  %s8 = inlined_call_operand.hbm [shape: f32[2,256,256], index: 8, kind: output, shape index: {1}]
  %9 = xla_tuple %s7, %s8
  %s10 = sld [smem:[#allocation0]]
  $region69: #{tpu_custom_call.1} parent=0
    _
  %s12 = ssub.s32 1, %s10
  %s13 = scalar_select 0, %s12, %s10
  %14 = sst [smem:[#allocation2]] %s6
  $region1: #{tpu_custom_call.1} parent=0
    #allocation3 [shape = 'u8[262144]{0}', space=vmem, size = 0x40000, scoped, tag = 'output window, operand 1']
    #allocation4 [shape = 's32[2]{0}', space=sflag, size = 0x8, scoped, tag = 'scoped memory for tpu_custom_call.1']
    %15 = vsyncpa [#allocation4], 0
    %s16 = scalar_lea.sflag [#allocation4], 1
    %17 = vsyncpa %s16, 0
    loop: start=0, step=1, limit=6
    $region2: #{tpu_custom_call.1} parent=1 // loop_pre_header
      _
    $region3: #{tpu_custom_call.1} parent=1 // loop_header
      %s19 = sphi 0, %s23
      %p20 = scmp.ge.s32.totalorder %s19, 6
      %s26 = sphi 0, %s38
      %s27 = sphi 0, %s34
      %s28 = sphi 0, %s26
      %s29 = sphi 0, %s27
      %s30 = sphi 0, %s28
      %s31 = sphi 0, %s29
      %s41 = sphi 0, %s43
      %s44 = sphi 0, %s41
      %s45 = sphi 0, %s44
      %s61 = sphi 0, %s45
      %s69 = sphi 0, %s71
      %s72 = sphi 0, %s69
      %s73 = sphi 0, %s72
      %s89 = sphi 0, %s73
      %s93 = sphi 0, %s93
      %s95 = sphi 0, %s93
      %s96 = sphi 0, %s95
      %s110 = sphi 0, %s96
      %s114 = sphi 0, %s114
      %s116 = sphi 0, %s114
      %s117 = sphi 0, %s116
      %s131 = sphi 0, %s117
      %s135 = sphi 0, %s135
      %s137 = sphi 0, %s135
      %s138 = sphi 0, %s137
      %s152 = sphi 0, %s138
      %s156 = sphi 0, %s156
      %s158 = sphi 0, %s156
      %s159 = sphi 0, %s158
      %s173 = sphi 0, %s159
      %s177 = sphi 0, %s177
      %s179 = sphi 0, %s177
      %s180 = sphi 0, %s179
      %s194 = sphi 0, %s180
      %s202 = sphi 0, %s204
      %s205 = sphi 0, %s202
      %s206 = sphi 0, %s205
      %s222 = sphi 0, %s206
      %s230 = sphi 0, %s232
      %s233 = sphi 0, %s230
      %s234 = sphi 0, %s233
      %s250 = sphi 0, %s234
    $region4: #{tpu_custom_call.1} parent=1 // loop_header_branch
      %22 = sbr.rel (%p20) target = $region8
    $region5: #{tpu_custom_call.1} parent=1 // loop_body
      %s24 = ssub.s32 %s19, 1
      %s25 = ssub.s32 %s19, 2
      %s32 = sadd.s32 1, %s27
      %p33 = scmp.ge.s32.totalorder %s32, 2
      %s34 = scalar_select %p33, 0, %s32
      %s35 = sadd.s32 1, %s26
      %s36 = scalar_select %p33, %s35, %s26
      %p37 = scmp.ge.s32.totalorder %s36, 2
      %s38 = scalar_select %p37, 0, %s36
      %s39 = ssub.s32 %s26, %s38
      %p40 = scmp.eq.s32.totalorder %s39, 0
      %s42 = sadd.s32 %s41, 1
      %s43 = scalar_select %p40, %s41, %s42
      %p46 = pneg %p40
      %p47 = scmp.eq.s32.totalorder %s19, 3
      %p48 = por %p46, %p47
      %p49 = scmp.ne.s32.totalorder %s41, %s44
      %p50 = scmp.eq.s32.totalorder %s19, 0
      %p51 = por %p49, %p50
      %p52 = scmp.ne.s32.totalorder %s41, %s44
      %p53 = scmp.eq.s32.totalorder %s24, 3
      %p54 = por %p52, %p53
      %p55 = scmp.ne.s32.totalorder %s44, %s45
      %p56 = scmp.eq.s32.totalorder %s24, 0
      %p57 = por %p55, %p56
      %p58 = scmp.ne.s32.totalorder %s44, %s45
      %p59 = scmp.eq.s32.totalorder %s25, 3
      %p60 = por %p58, %p59
      %p62 = scmp.ne.s32.totalorder %s45, %s61
      %p63 = scmp.eq.s32.totalorder %s25, 0
      %p64 = por %p62, %p63
      %s65 = ssub.s32 %s26, %s38
      %s66 = ssub.s32 %s27, %s34
      %s67 = sor.u32 %s65, %s66
      %p68 = scmp.eq.s32.totalorder %s67, 0
      %s70 = sadd.s32 %s69, 1
      %s71 = scalar_select %p68, %s69, %s70
      %p74 = pneg %p68
      %p75 = scmp.eq.s32.totalorder %s19, 3
      %p76 = por %p74, %p75
      %p77 = scmp.ne.s32.totalorder %s69, %s72
      %p78 = scmp.eq.s32.totalorder %s19, 0
      %p79 = por %p77, %p78
      %p80 = scmp.ne.s32.totalorder %s69, %s72
      %p81 = scmp.eq.s32.totalorder %s24, 3
      %p82 = por %p80, %p81
      %p83 = scmp.ne.s32.totalorder %s72, %s73
      %p84 = scmp.eq.s32.totalorder %s24, 0
      %p85 = por %p83, %p84
      %p86 = scmp.ne.s32.totalorder %s72, %s73
      %p87 = scmp.eq.s32.totalorder %s25, 3
      %p88 = por %p86, %p87
      %p90 = scmp.ne.s32.totalorder %s73, %s89
      %p91 = scmp.eq.s32.totalorder %s25, 0
      %p92 = por %p90, %p91
      %s94 = sadd.s32 %s93, 1
      %p97 = scmp.eq.s32.totalorder %s19, 3
      %p98 = scmp.ne.s32.totalorder %s93, %s95
      %p99 = scmp.eq.s32.totalorder %s19, 0
      %p100 = por %p98, %p99
      %p101 = scmp.ne.s32.totalorder %s93, %s95
      %p102 = scmp.eq.s32.totalorder %s24, 3
      %p103 = por %p101, %p102
      %p104 = scmp.ne.s32.totalorder %s95, %s96
      %p105 = scmp.eq.s32.totalorder %s24, 0
      %p106 = por %p104, %p105
      %p107 = scmp.ne.s32.totalorder %s95, %s96
      %p108 = scmp.eq.s32.totalorder %s25, 3
      %p109 = por %p107, %p108
      %p111 = scmp.ne.s32.totalorder %s96, %s110
      %p112 = scmp.eq.s32.totalorder %s25, 0
      %p113 = por %p111, %p112
      %s115 = sadd.s32 %s114, 1
      %p118 = scmp.eq.s32.totalorder %s19, 3
      %p119 = scmp.ne.s32.totalorder %s114, %s116
      %p120 = scmp.eq.s32.totalorder %s19, 0
      %p121 = por %p119, %p120
      %p122 = scmp.ne.s32.totalorder %s114, %s116
      %p123 = scmp.eq.s32.totalorder %s24, 3
      %p124 = por %p122, %p123
      %p125 = scmp.ne.s32.totalorder %s116, %s117
      %p126 = scmp.eq.s32.totalorder %s24, 0
      %p127 = por %p125, %p126
      %p128 = scmp.ne.s32.totalorder %s116, %s117
      %p129 = scmp.eq.s32.totalorder %s25, 3
      %p130 = por %p128, %p129
      %p132 = scmp.ne.s32.totalorder %s117, %s131
      %p133 = scmp.eq.s32.totalorder %s25, 0
      %p134 = por %p132, %p133
      %s136 = sadd.s32 %s135, 1
      %p139 = scmp.eq.s32.totalorder %s19, 3
      %p140 = scmp.ne.s32.totalorder %s135, %s137
      %p141 = scmp.eq.s32.totalorder %s19, 0
      %p142 = por %p140, %p141
      %p143 = scmp.ne.s32.totalorder %s135, %s137
      %p144 = scmp.eq.s32.totalorder %s24, 3
      %p145 = por %p143, %p144
      %p146 = scmp.ne.s32.totalorder %s137, %s138
      %p147 = scmp.eq.s32.totalorder %s24, 0
      %p148 = por %p146, %p147
      %p149 = scmp.ne.s32.totalorder %s137, %s138
      %p150 = scmp.eq.s32.totalorder %s25, 3
      %p151 = por %p149, %p150
      %p153 = scmp.ne.s32.totalorder %s138, %s152
      %p154 = scmp.eq.s32.totalorder %s25, 0
      %p155 = por %p153, %p154
      %s157 = sadd.s32 %s156, 1
      %p160 = scmp.eq.s32.totalorder %s19, 3
      %p161 = scmp.ne.s32.totalorder %s156, %s158
      %p162 = scmp.eq.s32.totalorder %s19, 0
      %p163 = por %p161, %p162
      %p164 = scmp.ne.s32.totalorder %s156, %s158
      %p165 = scmp.eq.s32.totalorder %s24, 3
      %p166 = por %p164, %p165
      %p167 = scmp.ne.s32.totalorder %s158, %s159
      %p168 = scmp.eq.s32.totalorder %s24, 0
      %p169 = por %p167, %p168
      %p170 = scmp.ne.s32.totalorder %s158, %s159
      %p171 = scmp.eq.s32.totalorder %s25, 3
      %p172 = por %p170, %p171
      %p174 = scmp.ne.s32.totalorder %s159, %s173
      %p175 = scmp.eq.s32.totalorder %s25, 0
      %p176 = por %p174, %p175
      %s178 = sadd.s32 %s177, 1
      %p181 = scmp.eq.s32.totalorder %s19, 3
      %p182 = scmp.ne.s32.totalorder %s177, %s179
      %p183 = scmp.eq.s32.totalorder %s19, 0
      %p184 = por %p182, %p183
      %p185 = scmp.ne.s32.totalorder %s177, %s179
      %p186 = scmp.eq.s32.totalorder %s24, 3
      %p187 = por %p185, %p186
      %p188 = scmp.ne.s32.totalorder %s179, %s180
      %p189 = scmp.eq.s32.totalorder %s24, 0
      %p190 = por %p188, %p189
      %p191 = scmp.ne.s32.totalorder %s179, %s180
      %p192 = scmp.eq.s32.totalorder %s25, 3
      %p193 = por %p191, %p192
      %p195 = scmp.ne.s32.totalorder %s180, %s194
      %p196 = scmp.eq.s32.totalorder %s25, 0
      %p197 = por %p195, %p196
      %s198 = ssub.s32 %s26, %s38
      %s199 = ssub.s32 %s27, %s34
      %s200 = sor.u32 %s198, %s199
      %p201 = scmp.eq.s32.totalorder %s200, 0
      %s203 = sadd.s32 %s202, 1
      %s204 = scalar_select %p201, %s202, %s203
      %p207 = pneg %p201
      %p208 = scmp.eq.s32.totalorder %s19, 3
      %p209 = por %p207, %p208
      %p210 = scmp.ne.s32.totalorder %s202, %s205
      %p211 = scmp.eq.s32.totalorder %s19, 0
      %p212 = por %p210, %p211
      %p213 = scmp.ne.s32.totalorder %s202, %s205
      %p214 = scmp.eq.s32.totalorder %s24, 3
      %p215 = por %p213, %p214
      %p216 = scmp.ne.s32.totalorder %s205, %s206
      %p217 = scmp.eq.s32.totalorder %s24, 0
      %p218 = por %p216, %p217
      %p219 = scmp.ne.s32.totalorder %s205, %s206
      %p220 = scmp.eq.s32.totalorder %s25, 3
      %p221 = por %p219, %p220
      %p223 = scmp.ne.s32.totalorder %s206, %s222
      %p224 = scmp.eq.s32.totalorder %s25, 0
      %p225 = por %p223, %p224
      %s226 = ssub.s32 %s26, %s38
      %s227 = ssub.s32 %s27, %s34
      %s228 = sor.u32 %s226, %s227
      %p229 = scmp.eq.s32.totalorder %s228, 0
      %s231 = sadd.s32 %s230, 1
      %s232 = scalar_select %p229, %s230, %s231
      %p235 = pneg %p229
      %p236 = scmp.eq.s32.totalorder %s19, 3
      %p237 = por %p235, %p236
      %p238 = scmp.ne.s32.totalorder %s230, %s233
      %p239 = scmp.eq.s32.totalorder %s19, 0
      %p240 = por %p238, %p239
      %p241 = scmp.ne.s32.totalorder %s230, %s233
      %p242 = scmp.eq.s32.totalorder %s24, 3
      %p243 = por %p241, %p242
      %p244 = scmp.ne.s32.totalorder %s233, %s234
      %p245 = scmp.eq.s32.totalorder %s24, 0
      %p246 = por %p244, %p245
      %p247 = scmp.ne.s32.totalorder %s233, %s234
      %p248 = scmp.eq.s32.totalorder %s25, 3
      %p249 = por %p247, %p248
      %p251 = scmp.ne.s32.totalorder %s234, %s250
      %p252 = scmp.eq.s32.totalorder %s25, 0
      %p253 = por %p251, %p252
      %p254 = scmp.le.s32.totalorder 1, %s19
      %p255 = scmp.lt.s32.totalorder %s19, 5
      %p256 = pnand %p254, %p255
      %p257 = pneg %p256
      // Predicated region
      $region9: #{tpu_custom_call.1} parent=5 // pred_check
        _
      $region10: #{tpu_custom_call.1} parent=5 // pred_check_branch
        %259 = sbr.rel (%p256) target = $region12
      $region11: #{tpu_custom_call.1} parent=5 // pred_region
        %s260 = ssub.s32 %s19, 1
        // Predicated region
        $region13: #{tpu_custom_call.1} parent=11 // pred_check
          %p261 = pneg %p106
        $region14: #{tpu_custom_call.1} parent=11 // pred_check_branch
          %263 = sbr.rel (%p261) target = $region16
        $region15: #{tpu_custom_call.1} parent=11 // pred_region
          _
        $region16: #{tpu_custom_call.1} parent=11 // pred_fallthru
          _
        // Predicated region
        $region17: #{tpu_custom_call.1} parent=11 // pred_check
          %p264 = pneg %p127
        $region18: #{tpu_custom_call.1} parent=11 // pred_check_branch
          %266 = sbr.rel (%p264) target = $region20
        $region19: #{tpu_custom_call.1} parent=11 // pred_region
          _
        $region20: #{tpu_custom_call.1} parent=11 // pred_fallthru
          _
        // Predicated region
        $region21: #{tpu_custom_call.1} parent=11 // pred_check
          %p267 = pneg %p148
        $region22: #{tpu_custom_call.1} parent=11 // pred_check_branch
          %269 = sbr.rel (%p267) target = $region24
        $region23: #{tpu_custom_call.1} parent=11 // pred_region
          _
        $region24: #{tpu_custom_call.1} parent=11 // pred_fallthru
          _
        // Predicated region
        $region25: #{tpu_custom_call.1} parent=11 // pred_check
          %p270 = pneg %p169
        $region26: #{tpu_custom_call.1} parent=11 // pred_check_branch
          %272 = sbr.rel (%p270) target = $region28
        $region27: #{tpu_custom_call.1} parent=11 // pred_region
          _
        $region28: #{tpu_custom_call.1} parent=11 // pred_fallthru
          _
        // Predicated region
        $region29: #{tpu_custom_call.1} parent=11 // pred_check
          %p273 = pneg %p190
        $region30: #{tpu_custom_call.1} parent=11 // pred_check_branch
          %275 = sbr.rel (%p273) target = $region32
        $region31: #{tpu_custom_call.1} parent=11 // pred_region
          _
        $region32: #{tpu_custom_call.1} parent=11 // pred_fallthru
          _
      $region12: #{tpu_custom_call.1} parent=5 // pred_fallthru
        _
      %p276 = scmp.lt.s32.totalorder %s19, 4
      // Predicated region
      $region33: #{tpu_custom_call.1} parent=5 // pred_check
        %p277 = pneg %p276
      $region34: #{tpu_custom_call.1} parent=5 // pred_check_branch
        %279 = sbr.rel (%p277) target = $region36
      $region35: #{tpu_custom_call.1} parent=5 // pred_region
        // Predicated region
        $region37: #{tpu_custom_call.1} parent=35 // pred_check
          %p280 = pneg %p51
        $region38: #{tpu_custom_call.1} parent=35 // pred_check_branch
          %282 = sbr.rel (%p280) target = $region40
        $region39: #{tpu_custom_call.1} parent=35 // pred_region
          %p283 = scmp.lt.s32.totalorder %s26, 1
          %s284 = scalar_select %p283, %s26, 1
          %s285 = smul.addr %s284, 32
          %s286 = smul.addr %s285, 8
          %s287 = scalar_lea.vmem %s0, %s286
        $region40: #{tpu_custom_call.1} parent=35 // pred_fallthru
          _
        // Predicated region
        $region41: #{tpu_custom_call.1} parent=35 // pred_check
          %p288 = pneg %p79
        $region42: #{tpu_custom_call.1} parent=35 // pred_check_branch
          %290 = sbr.rel (%p288) target = $region44
        $region43: #{tpu_custom_call.1} parent=35 // pred_region
          %s291 = smul.u32 16, %s27
          %p292 = scmp.lt.s32.totalorder %s26, 1
          %s293 = scalar_select %p292, %s26, 1
          %p294 = scmp.lt.s32.totalorder %s291, 31
          %s295 = scalar_select %p294, %s291, 31
          %s296 = smul.addr %s293, 32
          %s297 = sadd.s32 %s295, %s296
          %s298 = smul.addr %s297, 8
          %s299 = scalar_lea.vmem %s1, %s298
          %s300 = smul.u32 16, %s27
        $region44: #{tpu_custom_call.1} parent=35 // pred_fallthru
          _
      $region36: #{tpu_custom_call.1} parent=5 // pred_fallthru
        _
      %p301 = scmp.le.s32.totalorder 1, %s19
      %p302 = scmp.lt.s32.totalorder %s19, 5
      %p303 = pnand %p301, %p302
      %p304 = pneg %p303
      // Predicated region
      $region45: #{tpu_custom_call.1} parent=5 // pred_check
        _
      $region46: #{tpu_custom_call.1} parent=5 // pred_check_branch
        %306 = sbr.rel (%p303) target = $region48
      $region47: #{tpu_custom_call.1} parent=5 // pred_region
        %s307 = ssub.s32 %s19, 1
        %p308 = scmp.lt.s32.totalorder %s28, 1
        %s309 = scalar_select %p308, %s28, 1
        %s310 = smul.addr %s309, 32
        %s311 = smul.addr %s310, 8
        %s312 = scalar_lea.vmem %s0, %s311
        %p313 = pneg %p57
        %p314 = pneg %p54
        %s315 = smul.u32 16, %s29
        %p316 = scmp.lt.s32.totalorder %s28, 1
        %s317 = scalar_select %p316, %s28, 1
        %p318 = scmp.lt.s32.totalorder %s315, 31
        %s319 = scalar_select %p318, %s315, 31
        %s320 = smul.addr %s317, 32
        %s321 = sadd.s32 %s319, %s320
        %s322 = smul.addr %s321, 8
        %s323 = scalar_lea.vmem %s1, %s322
        %p324 = pneg %p85
        %p325 = pneg %p82
        %p326 = pneg %p106
        %p327 = pneg %p103
        %p328 = pneg %p127
        %p329 = pneg %p124
        %p330 = pneg %p148
        %p331 = pneg %p145
        %p332 = pneg %p169
        %p333 = pneg %p166
        %p334 = pneg %p190
        %p335 = pneg %p187
        %p336 = pneg %p218
        %p337 = pneg %p215
        %s338 = smul.u32 16, %s29
        %p339 = scmp.lt.s32.totalorder %s28, 1
        %s340 = scalar_select %p339, %s28, 1
        %p341 = scmp.lt.s32.totalorder %s338, 31
        %s342 = scalar_select %p341, %s338, 31
        %s343 = smul.addr %s340, 32
        %s344 = sadd.s32 %s342, %s343
        %s345 = smul.addr %s344, 8
        %s346 = scalar_lea.vmem %s7, %s345
        %p347 = pneg %p246
        %p348 = pneg %p243
        %s349 = sand.u32 %s233, 1
        %s350 = scalar_lea.sflag [#allocation4], %s349
        %s351 = sand.u32 %s233, 1
        %s352 = smul.addr %s351, 256
        %s353 = scalar_lea.vmem [#allocation3], %s352
        %p354 = scmp.lt.s32.totalorder %s28, 1
        %s355 = scalar_select %p354, %s28, 1
        %s356 = smul.addr %s355, 32
        %s357 = smul.addr %s356, 8
        %s358 = scalar_lea.vmem %s0, %s357
        %s359 = smul.u32 16, %s29
        %p360 = scmp.lt.s32.totalorder %s28, 1
        %s361 = scalar_select %p360, %s28, 1
        %p362 = scmp.lt.s32.totalorder %s359, 31
        %s363 = scalar_select %p362, %s359, 31
        %s364 = smul.addr %s361, 32
        %s365 = sadd.s32 %s363, %s364
        %s366 = smul.addr %s365, 8
        %s367 = scalar_lea.vmem %s1, %s366
        %s368 = smul.u32 16, %s29
        %s369 = smul.u32 16, %s29
        %p370 = scmp.lt.s32.totalorder %s28, 1
        %s371 = scalar_select %p370, %s28, 1
        %p372 = scmp.lt.s32.totalorder %s369, 31
        %s373 = scalar_select %p372, %s369, 31
        %s374 = smul.addr %s371, 32
        %s375 = sadd.s32 %s373, %s374
        %s376 = smul.addr %s375, 8
        %s377 = scalar_lea.vmem %s7, %s376
        %s378 = smul.u32 16, %s29
        %s379 = smul.u32 16, %s29
        %v381 = vld [vmem:[%s358] sm:$0xff]
        %v382 = vld [vmem:[%s358 + $0x8] sm:$0xff]
        %v383 = vld [vmem:[%s358 + $0x10] sm:$0xff]
        %v384 = vld [vmem:[%s358 + $0x18] sm:$0xff]
        %v385 = vld [vmem:[%s358 + $0x20] sm:$0xff]
        %v386 = vld [vmem:[%s358 + $0x28] sm:$0xff]
        %v387 = vld [vmem:[%s358 + $0x30] sm:$0xff]
        %v388 = vld [vmem:[%s358 + $0x38] sm:$0xff]
        %v389 = vld [vmem:[%s358 + $0x40] sm:$0xff]
        %v390 = vld [vmem:[%s358 + $0x48] sm:$0xff]
        %v391 = vld [vmem:[%s358 + $0x50] sm:$0xff]
        %v392 = vld [vmem:[%s358 + $0x58] sm:$0xff]
        %v393 = vld [vmem:[%s358 + $0x60] sm:$0xff]
        %v394 = vld [vmem:[%s358 + $0x68] sm:$0xff]
        %v395 = vld [vmem:[%s358 + $0x70] sm:$0xff]
        %v396 = vld [vmem:[%s358 + $0x78] sm:$0xff]
        %v397 = vld [vmem:[%s358 + $0x80] sm:$0xff]
        %v398 = vld [vmem:[%s358 + $0x88] sm:$0xff]
        %v399 = vld [vmem:[%s358 + $0x90] sm:$0xff]
        %v400 = vld [vmem:[%s358 + $0x98] sm:$0xff]
        %v401 = vld [vmem:[%s358 + $0xa0] sm:$0xff]
        %v402 = vld [vmem:[%s358 + $0xa8] sm:$0xff]
        %v403 = vld [vmem:[%s358 + $0xb0] sm:$0xff]
        %v404 = vld [vmem:[%s358 + $0xb8] sm:$0xff]
        %v405 = vld [vmem:[%s358 + $0xc0] sm:$0xff]
        %v406 = vld [vmem:[%s358 + $0xc8] sm:$0xff]
        %v407 = vld [vmem:[%s358 + $0xd0] sm:$0xff]
        %v408 = vld [vmem:[%s358 + $0xd8] sm:$0xff]
        %v409 = vld [vmem:[%s358 + $0xe0] sm:$0xff]
        %v410 = vld [vmem:[%s358 + $0xe8] sm:$0xff]
        %v411 = vld [vmem:[%s358 + $0xf0] sm:$0xff]
        %v412 = vld [vmem:[%s358 + $0xf8] sm:$0xff]
        %v413 = vld [vmem:[%s367] sm:$0xff]
        %v414 = vld [vmem:[%s367 + $0x8] sm:$0xff]
        %v415 = vld [vmem:[%s367 + $0x10] sm:$0xff]
        %v416 = vld [vmem:[%s367 + $0x18] sm:$0xff]
        %v417 = vld [vmem:[%s367 + $0x20] sm:$0xff]
        %v418 = vld [vmem:[%s367 + $0x28] sm:$0xff]
        %v419 = vld [vmem:[%s367 + $0x30] sm:$0xff]
        %v420 = vld [vmem:[%s367 + $0x38] sm:$0xff]
        %v421 = vld [vmem:[%s367 + $0x40] sm:$0xff]
        %v422 = vld [vmem:[%s367 + $0x48] sm:$0xff]
        %v423 = vld [vmem:[%s367 + $0x50] sm:$0xff]
        %v424 = vld [vmem:[%s367 + $0x58] sm:$0xff]
        %v425 = vld [vmem:[%s367 + $0x60] sm:$0xff]
        %v426 = vld [vmem:[%s367 + $0x68] sm:$0xff]
        %v427 = vld [vmem:[%s367 + $0x70] sm:$0xff]
        %v428 = vld [vmem:[%s367 + $0x78] sm:$0xff]
        %v429 = vld [vmem:[%s4] sm:$0xff]
        %v430 = vld [vmem:[%s4 + $0x8] sm:$0xff]
        %v431 = vld [vmem:[%s5] sm:$0x1]
        %v433 = vlaneseq
        %v434 = vshrl.u32 %v433, 7
        %v435 = vsub.s32 0, %v434
        %v436 = vrot.slane %v431, %v435
        %vm438 = vcmask 130048
        %v440 = vsel %vm438, %v381, 0
        %v443 = vsel %vm438, %v382, 0
        %v446 = vsel %vm438, %v383, 0
        %v449 = vsel %vm438, %v384, 0
        %v452 = vsel %vm438, %v385, 0
        %v455 = vsel %vm438, %v386, 0
        %v458 = vsel %vm438, %v387, 0
        %v461 = vsel %vm438, %v388, 0
        %v464 = vsel %vm438, %v389, 0
        %v467 = vsel %vm438, %v390, 0
        %v470 = vsel %vm438, %v391, 0
        %v473 = vsel %vm438, %v392, 0
        %v476 = vsel %vm438, %v393, 0
        %v479 = vsel %vm438, %v394, 0
        %v482 = vsel %vm438, %v395, 0
        %v485 = vsel %vm438, %v396, 0
        %v488 = vsel %vm438, %v397, 0
        %v491 = vsel %vm438, %v398, 0
        %v494 = vsel %vm438, %v399, 0
        %v497 = vsel %vm438, %v400, 0
        %v500 = vsel %vm438, %v401, 0
        %v503 = vsel %vm438, %v402, 0
        %v506 = vsel %vm438, %v403, 0
        %v509 = vsel %vm438, %v404, 0
        %v512 = vsel %vm438, %v405, 0
        %v515 = vsel %vm438, %v406, 0
        %v518 = vsel %vm438, %v407, 0
        %v521 = vsel %vm438, %v408, 0
        %v524 = vsel %vm438, %v409, 0
        %v527 = vsel %vm438, %v410, 0
        %v530 = vsel %vm438, %v411, 0
        %v533 = vsel %vm438, %v412, 0
        %535 = vmatprep.subr.mxu0 0.0
        %536 = vmatpush1.msra.mxu0 0.0
        %537 = vmatprep.subr.mxu0 0.0
        %538 = vmatpush1.msra.mxu0 0.0
        %539 = vmatprep.subr.mxu0 0.0
        %540 = vmatpush1.msra.mxu0 0.0
        %541 = vmatprep.subr.mxu0 0.0
        %542 = vmatpush1.msra.mxu0 0.0
        %543 = vmatprep.subr.mxu0 0.0
        %544 = vmatpush1.msra.mxu0 0.0
        %545 = vmatprep.subr.mxu0 0.0
        %546 = vmatpush1.msra.mxu0 0.0
        %547 = vmatprep.subr.mxu0 0.0
        %548 = vmatpush1.msra.mxu0 0.0
        %549 = vmatprep.subr.mxu0 0.0
        %550 = vmatpush1.msra.mxu0 0.0
        %551 = vmatprep.subr.mxu0 0.0
        %552 = vmatpush1.msra.mxu0 0.0
        %553 = vmatprep.subr.mxu0 0.0
        %554 = vmatpush1.msra.mxu0 0.0
        %555 = vmatprep.subr.mxu0 0.0
        %556 = vmatpush1.msra.mxu0 0.0
        %557 = vmatprep.subr.mxu0 0.0
        %558 = vmatpush1.msra.mxu0 0.0
        %559 = vmatprep.subr.mxu0 0.0
        %560 = vmatpush1.msra.mxu0 0.0
        %561 = vmatprep.subr.mxu0 0.0
        %562 = vmatpush1.msra.mxu0 0.0
        %563 = vmatprep.subr.mxu0 0.0
        %564 = vmatpush1.msra.mxu0 %v430
        %565 = vmatprep.subr.mxu0 0.0
        %566 = vmatpush1.msra.mxu0 %v429
        %567 = vmatprep.subr.mxu0 0.0
        %568 = vmatpush2.msra.mxu0 0.0
        %569 = vmatprep.subr.mxu0 0.0
        %570 = vmatpush2.msra.mxu0 0.0
        %571 = vmatprep.subr.mxu0 0.0
        %572 = vmatpush2.msra.mxu0 0.0
        %573 = vmatprep.subr.mxu0 0.0
        %574 = vmatpush2.msra.mxu0 0.0
        %575 = vmatprep.subr.mxu0 0.0
        %576 = vmatpush2.msra.mxu0 0.0
        %577 = vmatprep.subr.mxu0 0.0
        %578 = vmatpush2.msra.mxu0 0.0
        %579 = vmatprep.subr.mxu0 0.0
        %580 = vmatpush2.msra.mxu0 0.0
        %581 = vmatprep.subr.mxu0 0.0
        %582 = vmatpush2.msra.mxu0 0.0
        %583 = vmatprep.subr.mxu0 0.0
        %584 = vmatpush2.msra.mxu0 0.0
        %585 = vmatprep.subr.mxu0 0.0
        %586 = vmatpush2.msra.mxu0 0.0
        %587 = vmatprep.subr.mxu0 0.0
        %588 = vmatpush2.msra.mxu0 0.0
        %589 = vmatprep.subr.mxu0 0.0
        %590 = vmatpush2.msra.mxu0 0.0
        %591 = vmatprep.subr.mxu0 0.0
        %592 = vmatpush2.msra.mxu0 0.0
        %593 = vmatprep.subr.mxu0 0.0
        %594 = vmatpush2.msra.mxu0 0.0
        %595 = vmatprep.subr.mxu0 0.0
        %596 = vmatpush2.msra.mxu0 0.0
        %597 = vmatprep.subr.mxu0 0.0
        %598 = vmatpush2.msra.mxu0 0.0
        %599 = vmatprep.mubr.f32.mxu0 0.0
        %600 = vmatmul.mubr.f32.gmra.mxu0 %v440
        %v601 = vpop.f32.mrf.mxu0
        %v602 = vadd.f32 %v436, %v601
        %v603 = vpop.f32.mrf.mxu0
        %604 = vmatprep.mubr.f32.mxu0 0.0
        %605 = vmatmul.mubr.f32.gmra.mxu0 %v443
        %v606 = vpop.f32.mrf.mxu0
        %v607 = vadd.f32 %v436, %v606
        %v608 = vpop.f32.mrf.mxu0
        %609 = vmatprep.mubr.f32.mxu0 0.0
        %610 = vmatmul.mubr.f32.gmra.mxu0 %v446
        %v611 = vpop.f32.mrf.mxu0
        %v612 = vadd.f32 %v436, %v611
        %v613 = vpop.f32.mrf.mxu0
        %614 = vmatprep.mubr.f32.mxu0 0.0
        %615 = vmatmul.mubr.f32.gmra.mxu0 %v449
        %v616 = vpop.f32.mrf.mxu0
        %v617 = vadd.f32 %v436, %v616
        %v618 = vpop.f32.mrf.mxu0
        %619 = vmatprep.mubr.f32.mxu0 0.0
        %620 = vmatmul.mubr.f32.gmra.mxu0 %v452
        %v621 = vpop.f32.mrf.mxu0
        %v622 = vadd.f32 %v436, %v621
        %v623 = vpop.f32.mrf.mxu0
        %624 = vmatprep.mubr.f32.mxu0 0.0
        %625 = vmatmul.mubr.f32.gmra.mxu0 %v455
        %v626 = vpop.f32.mrf.mxu0
        %v627 = vadd.f32 %v436, %v626
        %v628 = vpop.f32.mrf.mxu0
        %629 = vmatprep.mubr.f32.mxu0 0.0
        %630 = vmatmul.mubr.f32.gmra.mxu0 %v458
        %v631 = vpop.f32.mrf.mxu0
        %v632 = vadd.f32 %v436, %v631
        %v633 = vpop.f32.mrf.mxu0
        %634 = vmatprep.mubr.f32.mxu0 0.0
        %635 = vmatmul.mubr.f32.gmra.mxu0 %v461
        %v636 = vpop.f32.mrf.mxu0
        %v637 = vadd.f32 %v436, %v636
        %v638 = vpop.f32.mrf.mxu0
        %639 = vmatprep.mubr.f32.mxu0 0.0
        %640 = vmatmul.mubr.f32.gmra.mxu0 %v464
        %v641 = vpop.f32.mrf.mxu0
        %v642 = vadd.f32 %v436, %v641
        %v643 = vpop.f32.mrf.mxu0
        %644 = vmatprep.mubr.f32.mxu0 0.0
        %645 = vmatmul.mubr.f32.gmra.mxu0 %v467
        %v646 = vpop.f32.mrf.mxu0
        %v647 = vadd.f32 %v436, %v646
        %v648 = vpop.f32.mrf.mxu0
        %649 = vmatprep.mubr.f32.mxu0 0.0
        %650 = vmatmul.mubr.f32.gmra.mxu0 %v470
        %v651 = vpop.f32.mrf.mxu0
        %v652 = vadd.f32 %v436, %v651
        %v653 = vpop.f32.mrf.mxu0
        %654 = vmatprep.mubr.f32.mxu0 0.0
        %655 = vmatmul.mubr.f32.gmra.mxu0 %v473
        %v656 = vpop.f32.mrf.mxu0
        %v657 = vadd.f32 %v436, %v656
        %v658 = vpop.f32.mrf.mxu0
        %659 = vmatprep.mubr.f32.mxu0 0.0
        %660 = vmatmul.mubr.f32.gmra.mxu0 %v476
        %v661 = vpop.f32.mrf.mxu0
        %v662 = vadd.f32 %v436, %v661
        %v663 = vpop.f32.mrf.mxu0
        %664 = vmatprep.mubr.f32.mxu0 0.0
        %665 = vmatmul.mubr.f32.gmra.mxu0 %v479
        %v666 = vpop.f32.mrf.mxu0
        %v667 = vadd.f32 %v436, %v666
        %v668 = vpop.f32.mrf.mxu0
        %669 = vmatprep.mubr.f32.mxu0 0.0
        %670 = vmatmul.mubr.f32.gmra.mxu0 %v482
        %v671 = vpop.f32.mrf.mxu0
        %v672 = vadd.f32 %v436, %v671
        %v673 = vpop.f32.mrf.mxu0
        %674 = vmatprep.mubr.f32.mxu0 0.0
        %675 = vmatmul.mubr.f32.gmra.mxu0 %v485
        %v676 = vpop.f32.mrf.mxu0
        %v677 = vadd.f32 %v436, %v676
        %v678 = vpop.f32.mrf.mxu0
        %679 = vmatprep.mubr.f32.mxu0 0.0
        %680 = vmatmul.mubr.f32.gmra.mxu0 %v488
        %v681 = vpop.f32.mrf.mxu0
        %v682 = vadd.f32 %v436, %v681
        %v683 = vpop.f32.mrf.mxu0
        %684 = vmatprep.mubr.f32.mxu0 0.0
        %685 = vmatmul.mubr.f32.gmra.mxu0 %v491
        %v686 = vpop.f32.mrf.mxu0
        %v687 = vadd.f32 %v436, %v686
        %v688 = vpop.f32.mrf.mxu0
        %689 = vmatprep.mubr.f32.mxu0 0.0
        %690 = vmatmul.mubr.f32.gmra.mxu0 %v494
        %v691 = vpop.f32.mrf.mxu0
        %v692 = vadd.f32 %v436, %v691
        %v693 = vpop.f32.mrf.mxu0
        %694 = vmatprep.mubr.f32.mxu0 0.0
        %695 = vmatmul.mubr.f32.gmra.mxu0 %v497
        %v696 = vpop.f32.mrf.mxu0
        %v697 = vadd.f32 %v436, %v696
        %v698 = vpop.f32.mrf.mxu0
        %699 = vmatprep.mubr.f32.mxu0 0.0
        %700 = vmatmul.mubr.f32.gmra.mxu0 %v500
        %v701 = vpop.f32.mrf.mxu0
        %v702 = vadd.f32 %v436, %v701
        %v703 = vpop.f32.mrf.mxu0
        %704 = vmatprep.mubr.f32.mxu0 0.0
        %705 = vmatmul.mubr.f32.gmra.mxu0 %v503
        %v706 = vpop.f32.mrf.mxu0
        %v707 = vadd.f32 %v436, %v706
        %v708 = vpop.f32.mrf.mxu0
        %709 = vmatprep.mubr.f32.mxu0 0.0
        %710 = vmatmul.mubr.f32.gmra.mxu0 %v506
        %v711 = vpop.f32.mrf.mxu0
        %v712 = vadd.f32 %v436, %v711
        %v713 = vpop.f32.mrf.mxu0
        %714 = vmatprep.mubr.f32.mxu0 0.0
        %715 = vmatmul.mubr.f32.gmra.mxu0 %v509
        %v716 = vpop.f32.mrf.mxu0
        %v717 = vadd.f32 %v436, %v716
        %v718 = vpop.f32.mrf.mxu0
        %719 = vmatprep.mubr.f32.mxu0 0.0
        %720 = vmatmul.mubr.f32.gmra.mxu0 %v512
        %v721 = vpop.f32.mrf.mxu0
        %v722 = vadd.f32 %v436, %v721
        %v723 = vpop.f32.mrf.mxu0
        %724 = vmatprep.mubr.f32.mxu0 0.0
        %725 = vmatmul.mubr.f32.gmra.mxu0 %v515
        %v726 = vpop.f32.mrf.mxu0
        %v727 = vadd.f32 %v436, %v726
        %v728 = vpop.f32.mrf.mxu0
        %729 = vmatprep.mubr.f32.mxu0 0.0
        %730 = vmatmul.mubr.f32.gmra.mxu0 %v518
        %v731 = vpop.f32.mrf.mxu0
        %v732 = vadd.f32 %v436, %v731
        %v733 = vpop.f32.mrf.mxu0
        %734 = vmatprep.mubr.f32.mxu0 0.0
        %735 = vmatmul.mubr.f32.gmra.mxu0 %v521
        %v736 = vpop.f32.mrf.mxu0
        %v737 = vadd.f32 %v436, %v736
        %v738 = vpop.f32.mrf.mxu0
        %739 = vmatprep.mubr.f32.mxu0 0.0
        %740 = vmatmul.mubr.f32.gmra.mxu0 %v524
        %v741 = vpop.f32.mrf.mxu0
        %v742 = vadd.f32 %v436, %v741
        %v743 = vpop.f32.mrf.mxu0
        %744 = vmatprep.mubr.f32.mxu0 0.0
        %745 = vmatmul.mubr.f32.gmra.mxu0 %v527
        %v746 = vpop.f32.mrf.mxu0
        %v747 = vadd.f32 %v436, %v746
        %v748 = vpop.f32.mrf.mxu0
        %749 = vmatprep.mubr.f32.mxu0 0.0
        %750 = vmatmul.mubr.f32.gmra.mxu0 %v530
        %v751 = vpop.f32.mrf.mxu0
        %v752 = vadd.f32 %v436, %v751
        %v753 = vpop.f32.mrf.mxu0
        %754 = vmatprep.mubr.f32.mxu0 0.0
        %755 = vmatmul.mubr.f32.gmra.mxu0 %v533
        %v756 = vpop.f32.mrf.mxu0
        %v757 = vadd.f32 %v436, %v756
        %v758 = vpop.f32.mrf.mxu0
        %759 = vdwg.mxu0
        %v760 = vld [vmem:[%s2] sm:$0xff]
        %v761 = vld [vmem:[%s2 + $0x8] sm:$0xff]
        %v762 = vld [vmem:[%s3] sm:$0x1]
        %v764 = vlaneseq
        %v765 = vshrl.u32 %v764, 7
        %v766 = vsub.s32 0, %v765
        %v767 = vrot.slane %v762, %v766
        %v770 = vsel %vm438, %v413, 0
        %v773 = vsel %vm438, %v414, 0
        %v776 = vsel %vm438, %v415, 0
        %v779 = vsel %vm438, %v416, 0
        %v782 = vsel %vm438, %v417, 0
        %v785 = vsel %vm438, %v418, 0
        %v788 = vsel %vm438, %v419, 0
        %v791 = vsel %vm438, %v420, 0
        %v794 = vsel %vm438, %v421, 0
        %v797 = vsel %vm438, %v422, 0
        %v800 = vsel %vm438, %v423, 0
        %v803 = vsel %vm438, %v424, 0
        %v806 = vsel %vm438, %v425, 0
        %v809 = vsel %vm438, %v426, 0
        %v812 = vsel %vm438, %v427, 0
        %v815 = vsel %vm438, %v428, 0
        %817 = vmatprep.subr.mxu0 0.0
        %818 = vmatpush1.msra.mxu0 0.0
        %819 = vmatprep.subr.mxu0 0.0
        %820 = vmatpush1.msra.mxu0 0.0
        %821 = vmatprep.subr.mxu0 0.0
        %822 = vmatpush1.msra.mxu0 0.0
        %823 = vmatprep.subr.mxu0 0.0
        %824 = vmatpush1.msra.mxu0 0.0
        %825 = vmatprep.subr.mxu0 0.0
        %826 = vmatpush1.msra.mxu0 0.0
        %827 = vmatprep.subr.mxu0 0.0
        %828 = vmatpush1.msra.mxu0 0.0
        %829 = vmatprep.subr.mxu0 0.0
        %830 = vmatpush1.msra.mxu0 0.0
        %831 = vmatprep.subr.mxu0 0.0
        %832 = vmatpush1.msra.mxu0 0.0
        %833 = vmatprep.subr.mxu0 0.0
        %834 = vmatpush1.msra.mxu0 0.0
        %835 = vmatprep.subr.mxu0 0.0
        %836 = vmatpush1.msra.mxu0 0.0
        %837 = vmatprep.subr.mxu0 0.0
        %838 = vmatpush1.msra.mxu0 0.0
        %839 = vmatprep.subr.mxu0 0.0
        %840 = vmatpush1.msra.mxu0 0.0
        %841 = vmatprep.subr.mxu0 0.0
        %842 = vmatpush1.msra.mxu0 0.0
        %843 = vmatprep.subr.mxu0 0.0
        %844 = vmatpush1.msra.mxu0 0.0
        %845 = vmatprep.subr.mxu0 0.0
        %846 = vmatpush1.msra.mxu0 %v761
        %847 = vmatprep.subr.mxu0 0.0
        %848 = vmatpush1.msra.mxu0 %v760
        %849 = vmatprep.subr.mxu0 0.0
        %850 = vmatpush2.msra.mxu0 0.0
        %851 = vmatprep.subr.mxu0 0.0
        %852 = vmatpush2.msra.mxu0 0.0
        %853 = vmatprep.subr.mxu0 0.0
        %854 = vmatpush2.msra.mxu0 0.0
        %855 = vmatprep.subr.mxu0 0.0
        %856 = vmatpush2.msra.mxu0 0.0
        %857 = vmatprep.subr.mxu0 0.0
        %858 = vmatpush2.msra.mxu0 0.0
        %859 = vmatprep.subr.mxu0 0.0
        %860 = vmatpush2.msra.mxu0 0.0
        %861 = vmatprep.subr.mxu0 0.0
        %862 = vmatpush2.msra.mxu0 0.0
        %863 = vmatprep.subr.mxu0 0.0
        %864 = vmatpush2.msra.mxu0 0.0
        %865 = vmatprep.subr.mxu0 0.0
        %866 = vmatpush2.msra.mxu0 0.0
        %867 = vmatprep.subr.mxu0 0.0
        %868 = vmatpush2.msra.mxu0 0.0
        %869 = vmatprep.subr.mxu0 0.0
        %870 = vmatpush2.msra.mxu0 0.0
        %871 = vmatprep.subr.mxu0 0.0
        %872 = vmatpush2.msra.mxu0 0.0
        %873 = vmatprep.subr.mxu0 0.0
        %874 = vmatpush2.msra.mxu0 0.0
        %875 = vmatprep.subr.mxu0 0.0
        %876 = vmatpush2.msra.mxu0 0.0
        %877 = vmatprep.subr.mxu0 0.0
        %878 = vmatpush2.msra.mxu0 0.0
        %879 = vmatprep.subr.mxu0 0.0
        %880 = vmatpush2.msra.mxu0 0.0
        %881 = vmatprep.mubr.f32.mxu0 0.0
        %882 = vmatmul.mubr.f32.gmra.mxu0 %v770
        %v883 = vpop.f32.mrf.mxu0
        %v884 = vadd.f32 %v767, %v883
        %v885 = vpop.f32.mrf.mxu0
        %886 = vmatprep.mubr.f32.mxu0 0.0
        %887 = vmatmul.mubr.f32.gmra.mxu0 %v773
        %v888 = vpop.f32.mrf.mxu0
        %v889 = vadd.f32 %v767, %v888
        %v890 = vpop.f32.mrf.mxu0
        %891 = vmatprep.mubr.f32.mxu0 0.0
        %892 = vmatmul.mubr.f32.gmra.mxu0 %v776
        %v893 = vpop.f32.mrf.mxu0
        %v894 = vadd.f32 %v767, %v893
        %v895 = vpop.f32.mrf.mxu0
        %896 = vmatprep.mubr.f32.mxu0 0.0
        %897 = vmatmul.mubr.f32.gmra.mxu0 %v779
        %v898 = vpop.f32.mrf.mxu0
        %v899 = vadd.f32 %v767, %v898
        %v900 = vpop.f32.mrf.mxu0
        %901 = vmatprep.mubr.f32.mxu0 0.0
        %902 = vmatmul.mubr.f32.gmra.mxu0 %v782
        %v903 = vpop.f32.mrf.mxu0
        %v904 = vadd.f32 %v767, %v903
        %v905 = vpop.f32.mrf.mxu0
        %906 = vmatprep.mubr.f32.mxu0 0.0
        %907 = vmatmul.mubr.f32.gmra.mxu0 %v785
        %v908 = vpop.f32.mrf.mxu0
        %v909 = vadd.f32 %v767, %v908
        %v910 = vpop.f32.mrf.mxu0
        %911 = vmatprep.mubr.f32.mxu0 0.0
        %912 = vmatmul.mubr.f32.gmra.mxu0 %v788
        %v913 = vpop.f32.mrf.mxu0
        %v914 = vadd.f32 %v767, %v913
        %v915 = vpop.f32.mrf.mxu0
        %916 = vmatprep.mubr.f32.mxu0 0.0
        %917 = vmatmul.mubr.f32.gmra.mxu0 %v791
        %v918 = vpop.f32.mrf.mxu0
        %v919 = vadd.f32 %v767, %v918
        %v920 = vpop.f32.mrf.mxu0
        %921 = vmatprep.mubr.f32.mxu0 0.0
        %922 = vmatmul.mubr.f32.gmra.mxu0 %v794
        %v923 = vpop.f32.mrf.mxu0
        %v924 = vadd.f32 %v767, %v923
        %v925 = vpop.f32.mrf.mxu0
        %926 = vmatprep.mubr.f32.mxu0 0.0
        %927 = vmatmul.mubr.f32.gmra.mxu0 %v797
        %v928 = vpop.f32.mrf.mxu0
        %v929 = vadd.f32 %v767, %v928
        %v930 = vpop.f32.mrf.mxu0
        %931 = vmatprep.mubr.f32.mxu0 0.0
        %932 = vmatmul.mubr.f32.gmra.mxu0 %v800
        %v933 = vpop.f32.mrf.mxu0
        %v934 = vadd.f32 %v767, %v933
        %v935 = vpop.f32.mrf.mxu0
        %936 = vmatprep.mubr.f32.mxu0 0.0
        %937 = vmatmul.mubr.f32.gmra.mxu0 %v803
        %v938 = vpop.f32.mrf.mxu0
        %v939 = vadd.f32 %v767, %v938
        %v940 = vpop.f32.mrf.mxu0
        %941 = vmatprep.mubr.f32.mxu0 0.0
        %942 = vmatmul.mubr.f32.gmra.mxu0 %v806
        %v943 = vpop.f32.mrf.mxu0
        %v944 = vadd.f32 %v767, %v943
        %v945 = vpop.f32.mrf.mxu0
        %946 = vmatprep.mubr.f32.mxu0 0.0
        %947 = vmatmul.mubr.f32.gmra.mxu0 %v809
        %v948 = vpop.f32.mrf.mxu0
        %v949 = vadd.f32 %v767, %v948
        %v950 = vpop.f32.mrf.mxu0
        %951 = vmatprep.mubr.f32.mxu0 0.0
        %952 = vmatmul.mubr.f32.gmra.mxu0 %v812
        %v953 = vpop.f32.mrf.mxu0
        %v954 = vadd.f32 %v767, %v953
        %v955 = vpop.f32.mrf.mxu0
        %956 = vmatprep.mubr.f32.mxu0 0.0
        %957 = vmatmul.mubr.f32.gmra.mxu0 %v815
        %v958 = vpop.f32.mrf.mxu0
        %v959 = vadd.f32 %v767, %v958
        %v960 = vpop.f32.mrf.mxu0
        %961 = vdwg.mxu0
        %v962 = vpack.c.bf16 %v889, %v884
        %v963 = vpack.c.bf16 %v899, %v894
        %v964 = vpack.c.bf16 %v909, %v904
        %v965 = vpack.c.bf16 %v919, %v914
        %v966 = vpack.c.bf16 %v929, %v924
        %v967 = vpack.c.bf16 %v939, %v934
        %v968 = vpack.c.bf16 %v949, %v944
        %v969 = vpack.c.bf16 %v959, %v954
        %v970 = vpack.c.bf16 %v607, %v602
        %v971 = vpack.c.bf16 %v617, %v612
        %v972 = vpack.c.bf16 %v627, %v622
        %v973 = vpack.c.bf16 %v637, %v632
        %v974 = vpack.c.bf16 %v647, %v642
        %v975 = vpack.c.bf16 %v657, %v652
        %v976 = vpack.c.bf16 %v667, %v662
        %v977 = vpack.c.bf16 %v677, %v672
        %v978 = vpack.c.bf16 %v687, %v682
        %v979 = vpack.c.bf16 %v697, %v692
        %v980 = vpack.c.bf16 %v707, %v702
        %v981 = vpack.c.bf16 %v717, %v712
        %v982 = vpack.c.bf16 %v727, %v722
        %v983 = vpack.c.bf16 %v737, %v732
        %v984 = vpack.c.bf16 %v747, %v742
        %v985 = vpack.c.bf16 %v757, %v752
        %vm986 = vcmask 15360
        %v988 = vsel %vm986, %v962, 0
        %v991 = vsel %vm986, %v963, 0
        %v994 = vsel %vm986, %v964, 0
        %v997 = vsel %vm986, %v965, 0
        %v1000 = vsel %vm986, %v966, 0
        %v1003 = vsel %vm986, %v967, 0
        %v1006 = vsel %vm986, %v968, 0
        %v1009 = vsel %vm986, %v969, 0
        %v1012 = vsel %vm986, %v970, 0
        %v1015 = vsel %vm986, %v971, 0
        %v1018 = vsel %vm986, %v972, 0
        %v1021 = vsel %vm986, %v973, 0
        %v1024 = vsel %vm986, %v974, 0
        %v1027 = vsel %vm986, %v975, 0
        %v1030 = vsel %vm986, %v976, 0
        %v1033 = vsel %vm986, %v977, 0
        %v1036 = vsel %vm986, %v978, 0
        %v1039 = vsel %vm986, %v979, 0
        %v1042 = vsel %vm986, %v980, 0
        %v1045 = vsel %vm986, %v981, 0
        %v1048 = vsel %vm986, %v982, 0
        %v1051 = vsel %vm986, %v983, 0
        %v1054 = vsel %vm986, %v984, 0
        %v1057 = vsel %vm986, %v985, 0
        %1059 = vmatprep.subr.bf16.mxu0 0
        %1060 = vmatpush1.bf16.xpose.msra.mxu0 %v1033
        %1061 = vmatprep.subr.bf16.mxu0 0
        %1062 = vmatpush1.bf16.xpose.msra.mxu0 %v1030
        %1063 = vmatprep.subr.bf16.mxu0 0
        %1064 = vmatpush1.bf16.xpose.msra.mxu0 %v1027
        %1065 = vmatprep.subr.bf16.mxu0 0
        %1066 = vmatpush1.bf16.xpose.msra.mxu0 %v1024
        %1067 = vmatprep.subr.bf16.mxu0 0
        %1068 = vmatpush1.bf16.xpose.msra.mxu0 %v1021
        %1069 = vmatprep.subr.bf16.mxu0 0
        %1070 = vmatpush1.bf16.xpose.msra.mxu0 %v1018
        %1071 = vmatprep.subr.bf16.mxu0 0
        %1072 = vmatpush1.bf16.xpose.msra.mxu0 %v1015
        %1073 = vmatprep.subr.bf16.mxu0 0
        %1074 = vmatpush1.bf16.xpose.msra.mxu0 %v1012
        %1075 = vmatprep.subr.bf16.mxu0 0
        %1076 = vmatpush2.bf16.xpose.msra.mxu0 %v1057
        %1077 = vmatprep.subr.bf16.mxu0 0
        %1078 = vmatpush2.bf16.xpose.msra.mxu0 %v1054
        %1079 = vmatprep.subr.bf16.mxu0 0
        %1080 = vmatpush2.bf16.xpose.msra.mxu0 %v1051
        %1081 = vmatprep.subr.bf16.mxu0 0
        %1082 = vmatpush2.bf16.xpose.msra.mxu0 %v1048
        %1083 = vmatprep.subr.bf16.mxu0 0
        %1084 = vmatpush2.bf16.xpose.msra.mxu0 %v1045
        %1085 = vmatprep.subr.bf16.mxu0 0
        %1086 = vmatpush2.bf16.xpose.msra.mxu0 %v1042
        %1087 = vmatprep.subr.bf16.mxu0 0
        %1088 = vmatpush2.bf16.xpose.msra.mxu0 %v1039
        %1089 = vmatprep.subr.bf16.mxu0 0
        %1090 = vmatpush2.bf16.xpose.msra.mxu0 %v1036
        %1091 = vmatprep.mubr.bf16.mxu0 0
        %1092 = vmatmul.mubr.bf16.gmra.mxu0 %v988
        %v1093 = vpop.f32.mrf.mxu0
        %v1094 = vadd.f32 0.0, %v1093
        %v1095 = vpop.f32.mrf.mxu0
        %v1096 = vadd.f32 0.0, %v1095
        %v1097 = vpop.f32.mrf.mxu0
        %v1098 = vadd.f32 0.0, %v1097
        %v1099 = vpop.f32.mrf.mxu0
        %v1100 = vadd.f32 0.0, %v1099
        %1101 = vmatprep.mubr.bf16.mxu0 0
        %1102 = vmatmul.mubr.bf16.gmra.mxu0 %v991
        %v1103 = vpop.f32.mrf.mxu0
        %v1104 = vadd.f32 0.0, %v1103
        %v1105 = vpop.f32.mrf.mxu0
        %v1106 = vadd.f32 0.0, %v1105
        %v1107 = vpop.f32.mrf.mxu0
        %v1108 = vadd.f32 0.0, %v1107
        %v1109 = vpop.f32.mrf.mxu0
        %v1110 = vadd.f32 0.0, %v1109
        %1111 = vmatprep.mubr.bf16.mxu0 0
        %1112 = vmatmul.mubr.bf16.gmra.mxu0 %v994
        %v1113 = vpop.f32.mrf.mxu0
        %v1114 = vadd.f32 0.0, %v1113
        %v1115 = vpop.f32.mrf.mxu0
        %v1116 = vadd.f32 0.0, %v1115
        %v1117 = vpop.f32.mrf.mxu0
        %v1118 = vadd.f32 0.0, %v1117
        %v1119 = vpop.f32.mrf.mxu0
        %v1120 = vadd.f32 0.0, %v1119
        %1121 = vmatprep.mubr.bf16.mxu0 0
        %1122 = vmatmul.mubr.bf16.gmra.mxu0 %v997
        %v1123 = vpop.f32.mrf.mxu0
        %v1124 = vadd.f32 0.0, %v1123
        %v1125 = vpop.f32.mrf.mxu0
        %v1126 = vadd.f32 0.0, %v1125
        %v1127 = vpop.f32.mrf.mxu0
        %v1128 = vadd.f32 0.0, %v1127
        %v1129 = vpop.f32.mrf.mxu0
        %v1130 = vadd.f32 0.0, %v1129
        %1131 = vmatprep.mubr.bf16.mxu0 0
        %1132 = vmatmul.mubr.bf16.gmra.mxu0 %v1000
        %v1133 = vpop.f32.mrf.mxu0
        %v1134 = vadd.f32 0.0, %v1133
        %v1135 = vpop.f32.mrf.mxu0
        %v1136 = vadd.f32 0.0, %v1135
        %v1137 = vpop.f32.mrf.mxu0
        %v1138 = vadd.f32 0.0, %v1137
        %v1139 = vpop.f32.mrf.mxu0
        %v1140 = vadd.f32 0.0, %v1139
        %1141 = vmatprep.mubr.bf16.mxu0 0
        %1142 = vmatmul.mubr.bf16.gmra.mxu0 %v1003
        %v1143 = vpop.f32.mrf.mxu0
        %v1144 = vadd.f32 0.0, %v1143
        %v1145 = vpop.f32.mrf.mxu0
        %v1146 = vadd.f32 0.0, %v1145
        %v1147 = vpop.f32.mrf.mxu0
        %v1148 = vadd.f32 0.0, %v1147
        %v1149 = vpop.f32.mrf.mxu0
        %v1150 = vadd.f32 0.0, %v1149
        %1151 = vmatprep.mubr.bf16.mxu0 0
        %1152 = vmatmul.mubr.bf16.gmra.mxu0 %v1006
        %v1153 = vpop.f32.mrf.mxu0
        %v1154 = vadd.f32 0.0, %v1153
        %v1155 = vpop.f32.mrf.mxu0
        %v1156 = vadd.f32 0.0, %v1155
        %v1157 = vpop.f32.mrf.mxu0
        %v1158 = vadd.f32 0.0, %v1157
        %v1159 = vpop.f32.mrf.mxu0
        %v1160 = vadd.f32 0.0, %v1159
        %1161 = vmatprep.mubr.bf16.mxu0 0
        %1162 = vmatmul.mubr.bf16.gmra.mxu0 %v1009
        %v1163 = vpop.f32.mrf.mxu0
        %v1164 = vadd.f32 0.0, %v1163
        %v1165 = vpop.f32.mrf.mxu0
        %v1166 = vadd.f32 0.0, %v1165
        %v1167 = vpop.f32.mrf.mxu0
        %v1168 = vadd.f32 0.0, %v1167
        %v1169 = vpop.f32.mrf.mxu0
        %v1170 = vadd.f32 0.0, %v1169
        %1171 = vdwg.mxu0
        %v1172 = vmax.f32 %v1094, %v1096
        %1173 = vmax.xlane.f32.xlu0 %v1172
        %v1174 = vpop.xlane.xlu0 %1173
        %v1175 = vmax.f32 %v1098, %v1100
        %1176 = vmax.xlane.f32.xlu0 %v1175
        %v1177 = vpop.xlane.xlu0 %1176
        %v1178 = vmax.f32 %v1104, %v1106
        %1179 = vmax.xlane.f32.xlu0 %v1178
        %v1180 = vpop.xlane.xlu0 %1179
        %v1181 = vmax.f32 %v1108, %v1110
        %1182 = vmax.xlane.f32.xlu0 %v1181
        %v1183 = vpop.xlane.xlu0 %1182
        %v1184 = vmax.f32 %v1114, %v1116
        %1185 = vmax.xlane.f32.xlu0 %v1184
        %v1186 = vpop.xlane.xlu0 %1185
        %v1187 = vmax.f32 %v1118, %v1120
        %1188 = vmax.xlane.f32.xlu0 %v1187
        %v1189 = vpop.xlane.xlu0 %1188
        %v1190 = vmax.f32 %v1124, %v1126
        %1191 = vmax.xlane.f32.xlu0 %v1190
        %v1192 = vpop.xlane.xlu0 %1191
        %v1193 = vmax.f32 %v1128, %v1130
        %1194 = vmax.xlane.f32.xlu0 %v1193
        %v1195 = vpop.xlane.xlu0 %1194
        %v1196 = vmax.f32 %v1134, %v1136
        %1197 = vmax.xlane.f32.xlu0 %v1196
        %v1198 = vpop.xlane.xlu0 %1197
        %v1199 = vmax.f32 %v1138, %v1140
        %1200 = vmax.xlane.f32.xlu0 %v1199
        %v1201 = vpop.xlane.xlu0 %1200
        %v1202 = vmax.f32 %v1144, %v1146
        %1203 = vmax.xlane.f32.xlu0 %v1202
        %v1204 = vpop.xlane.xlu0 %1203
        %v1205 = vmax.f32 %v1148, %v1150
        %1206 = vmax.xlane.f32.xlu0 %v1205
        %v1207 = vpop.xlane.xlu0 %1206
        %v1208 = vmax.f32 %v1154, %v1156
        %1209 = vmax.xlane.f32.xlu0 %v1208
        %v1210 = vpop.xlane.xlu0 %1209
        %v1211 = vmax.f32 %v1158, %v1160
        %1212 = vmax.xlane.f32.xlu0 %v1211
        %v1213 = vpop.xlane.xlu0 %1212
        %v1214 = vmax.f32 %v1164, %v1166
        %1215 = vmax.xlane.f32.xlu0 %v1214
        %v1216 = vpop.xlane.xlu0 %1215
        %v1217 = vmax.f32 %v1168, %v1170
        %1218 = vmax.xlane.f32.xlu0 %v1217
        %v1219 = vpop.xlane.xlu0 %1218
        %v1220 = vsub.f32 %v1094, %v1174
        %v1221 = vsub.f32 %v1096, %v1174
        %v1222 = vsub.f32 %v1098, %v1177
        %v1223 = vsub.f32 %v1100, %v1177
        %v1224 = vsub.f32 %v1104, %v1180
        %v1225 = vsub.f32 %v1106, %v1180
        %v1226 = vsub.f32 %v1108, %v1183
        %v1227 = vsub.f32 %v1110, %v1183
        %v1228 = vsub.f32 %v1114, %v1186
        %v1229 = vsub.f32 %v1116, %v1186
        %v1230 = vsub.f32 %v1118, %v1189
        %v1231 = vsub.f32 %v1120, %v1189
        %v1232 = vsub.f32 %v1124, %v1192
        %v1233 = vsub.f32 %v1126, %v1192
        %v1234 = vsub.f32 %v1128, %v1195
        %v1235 = vsub.f32 %v1130, %v1195
        %v1236 = vsub.f32 %v1134, %v1198
        %v1237 = vsub.f32 %v1136, %v1198
        %v1238 = vsub.f32 %v1138, %v1201
        %v1239 = vsub.f32 %v1140, %v1201
        %v1240 = vsub.f32 %v1144, %v1204
        %v1241 = vsub.f32 %v1146, %v1204
        %v1242 = vsub.f32 %v1148, %v1207
        %v1243 = vsub.f32 %v1150, %v1207
        %v1244 = vsub.f32 %v1154, %v1210
        %v1245 = vsub.f32 %v1156, %v1210
        %v1246 = vsub.f32 %v1158, %v1213
        %v1247 = vsub.f32 %v1160, %v1213
        %v1248 = vsub.f32 %v1164, %v1216
        %v1249 = vsub.f32 %v1166, %v1216
        %v1250 = vsub.f32 %v1168, %v1219
        %v1251 = vsub.f32 %v1170, %v1219
        %v1252 = vmul.f32 %v1220, 1.442695
        %v1253 = vpow.pop %v1252
        %v1254 = vmul.f32 %v1221, 1.442695
        %v1255 = vpow.pop %v1254
        %v1256 = vmul.f32 %v1222, 1.442695
        %v1257 = vpow.pop %v1256
        %v1258 = vmul.f32 %v1223, 1.442695
        %v1259 = vpow.pop %v1258
        %v1260 = vmul.f32 %v1224, 1.442695
        %v1261 = vpow.pop %v1260
        %v1262 = vmul.f32 %v1225, 1.442695
        %v1263 = vpow.pop %v1262
        %v1264 = vmul.f32 %v1226, 1.442695
        %v1265 = vpow.pop %v1264
        %v1266 = vmul.f32 %v1227, 1.442695
        %v1267 = vpow.pop %v1266
        %v1268 = vmul.f32 %v1228, 1.442695
        %v1269 = vpow.pop %v1268
        %v1270 = vmul.f32 %v1229, 1.442695
        %v1271 = vpow.pop %v1270
        %v1272 = vmul.f32 %v1230, 1.442695
        %v1273 = vpow.pop %v1272
        %v1274 = vmul.f32 %v1231, 1.442695
        %v1275 = vpow.pop %v1274
        %v1276 = vmul.f32 %v1232, 1.442695
        %v1277 = vpow.pop %v1276
        %v1278 = vmul.f32 %v1233, 1.442695
        %v1279 = vpow.pop %v1278
        %v1280 = vmul.f32 %v1234, 1.442695
        %v1281 = vpow.pop %v1280
        %v1282 = vmul.f32 %v1235, 1.442695
        %v1283 = vpow.pop %v1282
        %v1284 = vmul.f32 %v1236, 1.442695
        %v1285 = vpow.pop %v1284
        %v1286 = vmul.f32 %v1237, 1.442695
        %v1287 = vpow.pop %v1286
        %v1288 = vmul.f32 %v1238, 1.442695
        %v1289 = vpow.pop %v1288
        %v1290 = vmul.f32 %v1239, 1.442695
        %v1291 = vpow.pop %v1290
        %v1292 = vmul.f32 %v1240, 1.442695
        %v1293 = vpow.pop %v1292
        %v1294 = vmul.f32 %v1241, 1.442695
        %v1295 = vpow.pop %v1294
        %v1296 = vmul.f32 %v1242, 1.442695
        %v1297 = vpow.pop %v1296
        %v1298 = vmul.f32 %v1243, 1.442695
        %v1299 = vpow.pop %v1298
        %v1300 = vmul.f32 %v1244, 1.442695
        %v1301 = vpow.pop %v1300
        %v1302 = vmul.f32 %v1245, 1.442695
        %v1303 = vpow.pop %v1302
        %v1304 = vmul.f32 %v1246, 1.442695
        %v1305 = vpow.pop %v1304
        %v1306 = vmul.f32 %v1247, 1.442695
        %v1307 = vpow.pop %v1306
        %v1308 = vmul.f32 %v1248, 1.442695
        %v1309 = vpow.pop %v1308
        %v1310 = vmul.f32 %v1249, 1.442695
        %v1311 = vpow.pop %v1310
        %v1312 = vmul.f32 %v1250, 1.442695
        %v1313 = vpow.pop %v1312
        %v1314 = vmul.f32 %v1251, 1.442695
        %v1315 = vpow.pop %v1314
        %v1316 = vadd.f32 %v1253, %v1255
        %1317 = vadd.xlane.f32.xlu0 %v1316
        %v1318 = vpop.xlane.xlu0 %1317
        %v1319 = vadd.f32 %v1257, %v1259
        %1320 = vadd.xlane.f32.xlu0 %v1319
        %v1321 = vpop.xlane.xlu0 %1320
        %v1322 = vadd.f32 %v1261, %v1263
        %1323 = vadd.xlane.f32.xlu0 %v1322
        %v1324 = vpop.xlane.xlu0 %1323
        %v1325 = vadd.f32 %v1265, %v1267
        %1326 = vadd.xlane.f32.xlu0 %v1325
        %v1327 = vpop.xlane.xlu0 %1326
        %v1328 = vadd.f32 %v1269, %v1271
        %1329 = vadd.xlane.f32.xlu0 %v1328
        %v1330 = vpop.xlane.xlu0 %1329
        %v1331 = vadd.f32 %v1273, %v1275
        %1332 = vadd.xlane.f32.xlu0 %v1331
        %v1333 = vpop.xlane.xlu0 %1332
        %v1334 = vadd.f32 %v1277, %v1279
        %1335 = vadd.xlane.f32.xlu0 %v1334
        %v1336 = vpop.xlane.xlu0 %1335
        %v1337 = vadd.f32 %v1281, %v1283
        %1338 = vadd.xlane.f32.xlu0 %v1337
        %v1339 = vpop.xlane.xlu0 %1338
        %v1340 = vadd.f32 %v1285, %v1287
        %1341 = vadd.xlane.f32.xlu0 %v1340
        %v1342 = vpop.xlane.xlu0 %1341
        %v1343 = vadd.f32 %v1289, %v1291
        %1344 = vadd.xlane.f32.xlu0 %v1343
        %v1345 = vpop.xlane.xlu0 %1344
        %v1346 = vadd.f32 %v1293, %v1295
        %1347 = vadd.xlane.f32.xlu0 %v1346
        %v1348 = vpop.xlane.xlu0 %1347
        %v1349 = vadd.f32 %v1297, %v1299
        %1350 = vadd.xlane.f32.xlu0 %v1349
        %v1351 = vpop.xlane.xlu0 %1350
        %v1352 = vadd.f32 %v1301, %v1303
        %1353 = vadd.xlane.f32.xlu0 %v1352
        %v1354 = vpop.xlane.xlu0 %1353
        %v1355 = vadd.f32 %v1305, %v1307
        %1356 = vadd.xlane.f32.xlu0 %v1355
        %v1357 = vpop.xlane.xlu0 %1356
        %v1358 = vadd.f32 %v1309, %v1311
        %1359 = vadd.xlane.f32.xlu0 %v1358
        %v1360 = vpop.xlane.xlu0 %1359
        %v1361 = vadd.f32 %v1313, %v1315
        %1362 = vadd.xlane.f32.xlu0 %v1361
        %v1363 = vpop.xlane.xlu0 %1362
        %v1364 = vrcp.pop %v1318
        %v1365 = vrcp.pop %v1321
        %v1366 = vrcp.pop %v1324
        %v1367 = vrcp.pop %v1327
        %v1368 = vrcp.pop %v1330
        %v1369 = vrcp.pop %v1333
        %v1370 = vrcp.pop %v1336
        %v1371 = vrcp.pop %v1339
        %v1372 = vrcp.pop %v1342
        %v1373 = vrcp.pop %v1345
        %v1374 = vrcp.pop %v1348
        %v1375 = vrcp.pop %v1351
        %v1376 = vrcp.pop %v1354
        %v1377 = vrcp.pop %v1357
        %v1378 = vrcp.pop %v1360
        %v1379 = vrcp.pop %v1363
        %v1380 = vmul.f32 %v1253, %v1364
        %v1381 = vmul.f32 %v1255, %v1364
        %v1382 = vmul.f32 %v1257, %v1365
        %v1383 = vmul.f32 %v1259, %v1365
        %v1384 = vmul.f32 %v1261, %v1366
        %v1385 = vmul.f32 %v1263, %v1366
        %v1386 = vmul.f32 %v1265, %v1367
        %v1387 = vmul.f32 %v1267, %v1367
        %v1388 = vmul.f32 %v1269, %v1368
        %v1389 = vmul.f32 %v1271, %v1368
        %v1390 = vmul.f32 %v1273, %v1369
        %v1391 = vmul.f32 %v1275, %v1369
        %v1392 = vmul.f32 %v1277, %v1370
        %v1393 = vmul.f32 %v1279, %v1370
        %v1394 = vmul.f32 %v1281, %v1371
        %v1395 = vmul.f32 %v1283, %v1371
        %v1396 = vmul.f32 %v1285, %v1372
        %v1397 = vmul.f32 %v1287, %v1372
        %v1398 = vmul.f32 %v1289, %v1373
        %v1399 = vmul.f32 %v1291, %v1373
        %v1400 = vmul.f32 %v1293, %v1374
        %v1401 = vmul.f32 %v1295, %v1374
        %v1402 = vmul.f32 %v1297, %v1375
        %v1403 = vmul.f32 %v1299, %v1375
        %v1404 = vmul.f32 %v1301, %v1376
        %v1405 = vmul.f32 %v1303, %v1376
        %v1406 = vmul.f32 %v1305, %v1377
        %v1407 = vmul.f32 %v1307, %v1377
        %v1408 = vmul.f32 %v1309, %v1378
        %v1409 = vmul.f32 %v1311, %v1378
        %v1410 = vmul.f32 %v1313, %v1379
        %v1411 = vmul.f32 %v1315, %v1379
        %1412 = vst [vmem:[%s353] sm:$0xff] %v1380
        %1413 = vst [vmem:[%s353 + $0x8] sm:$0xff] %v1381
        %1414 = vst [vmem:[%s353 + $0x10] sm:$0xff] %v1382
        %1415 = vst [vmem:[%s353 + $0x18] sm:$0xff] %v1383
        %1416 = vst [vmem:[%s353 + $0x20] sm:$0xff] %v1384
        %1417 = vst [vmem:[%s353 + $0x28] sm:$0xff] %v1385
        %1418 = vst [vmem:[%s353 + $0x30] sm:$0xff] %v1386
        %1419 = vst [vmem:[%s353 + $0x38] sm:$0xff] %v1387
        %1420 = vst [vmem:[%s353 + $0x40] sm:$0xff] %v1388
        %1421 = vst [vmem:[%s353 + $0x48] sm:$0xff] %v1389
        %1422 = vst [vmem:[%s353 + $0x50] sm:$0xff] %v1390
        %1423 = vst [vmem:[%s353 + $0x58] sm:$0xff] %v1391
        %1424 = vst [vmem:[%s353 + $0x60] sm:$0xff] %v1392
        %1425 = vst [vmem:[%s353 + $0x68] sm:$0xff] %v1393
        %1426 = vst [vmem:[%s353 + $0x70] sm:$0xff] %v1394
        %1427 = vst [vmem:[%s353 + $0x78] sm:$0xff] %v1395
        %1428 = vst [vmem:[%s353 + $0x80] sm:$0xff] %v1396
        %1429 = vst [vmem:[%s353 + $0x88] sm:$0xff] %v1397
        %1430 = vst [vmem:[%s353 + $0x90] sm:$0xff] %v1398
        %1431 = vst [vmem:[%s353 + $0x98] sm:$0xff] %v1399
        %1432 = vst [vmem:[%s353 + $0xa0] sm:$0xff] %v1400
        %1433 = vst [vmem:[%s353 + $0xa8] sm:$0xff] %v1401
        %1434 = vst [vmem:[%s353 + $0xb0] sm:$0xff] %v1402
        %1435 = vst [vmem:[%s353 + $0xb8] sm:$0xff] %v1403
        %1436 = vst [vmem:[%s353 + $0xc0] sm:$0xff] %v1404
        %1437 = vst [vmem:[%s353 + $0xc8] sm:$0xff] %v1405
        %1438 = vst [vmem:[%s353 + $0xd0] sm:$0xff] %v1406
        %1439 = vst [vmem:[%s353 + $0xd8] sm:$0xff] %v1407
        %1440 = vst [vmem:[%s353 + $0xe0] sm:$0xff] %v1408
        %1441 = vst [vmem:[%s353 + $0xe8] sm:$0xff] %v1409
        %1442 = vst [vmem:[%s353 + $0xf0] sm:$0xff] %v1410
        %1443 = vst [vmem:[%s353 + $0xf8] sm:$0xff] %v1411
        %v1444 = vpack.c.bf16 %v1382, %v1380
        %v1445 = vpack.c.bf16 %v1383, %v1381
        %v1446 = vpack.c.bf16 %v1386, %v1384
        %v1447 = vpack.c.bf16 %v1387, %v1385
        %v1448 = vpack.c.bf16 %v1390, %v1388
        %v1449 = vpack.c.bf16 %v1391, %v1389
        %v1450 = vpack.c.bf16 %v1394, %v1392
        %v1451 = vpack.c.bf16 %v1395, %v1393
        %v1452 = vpack.c.bf16 %v1398, %v1396
        %v1453 = vpack.c.bf16 %v1399, %v1397
        %v1454 = vpack.c.bf16 %v1402, %v1400
        %v1455 = vpack.c.bf16 %v1403, %v1401
        %v1456 = vpack.c.bf16 %v1406, %v1404
        %v1457 = vpack.c.bf16 %v1407, %v1405
        %v1458 = vpack.c.bf16 %v1410, %v1408
        %v1459 = vpack.c.bf16 %v1411, %v1409
        %1476 = vrot.lane.b32.xlu0 %v970, 126
        %v1477 = vpop.permute.xlu0 %1476
        %1478 = vrot.lane.b32.xlu0 %v971, 126
        %v1479 = vpop.permute.xlu0 %1478
        %1480 = vrot.lane.b32.xlu0 %v972, 126
        %v1481 = vpop.permute.xlu0 %1480
        %1482 = vrot.lane.b32.xlu0 %v973, 126
        %v1483 = vpop.permute.xlu0 %1482
        %1484 = vrot.lane.b32.xlu0 %v974, 126
        %v1485 = vpop.permute.xlu0 %1484
        %1486 = vrot.lane.b32.xlu0 %v975, 126
        %v1487 = vpop.permute.xlu0 %1486
        %1488 = vrot.lane.b32.xlu0 %v976, 126
        %v1489 = vpop.permute.xlu0 %1488
        %1490 = vrot.lane.b32.xlu0 %v977, 126
        %v1491 = vpop.permute.xlu0 %1490
        %1492 = vrot.lane.b32.xlu0 %v978, 126
        %v1493 = vpop.permute.xlu0 %1492
        %1494 = vrot.lane.b32.xlu0 %v979, 126
        %v1495 = vpop.permute.xlu0 %1494
        %1496 = vrot.lane.b32.xlu0 %v980, 126
        %v1497 = vpop.permute.xlu0 %1496
        %1498 = vrot.lane.b32.xlu0 %v981, 126
        %v1499 = vpop.permute.xlu0 %1498
        %1500 = vrot.lane.b32.xlu0 %v982, 126
        %v1501 = vpop.permute.xlu0 %1500
        %1502 = vrot.lane.b32.xlu0 %v983, 126
        %v1503 = vpop.permute.xlu0 %1502
        %1504 = vrot.lane.b32.xlu0 %v984, 126
        %v1505 = vpop.permute.xlu0 %1504
        %1506 = vrot.lane.b32.xlu0 %v985, 126
        %v1507 = vpop.permute.xlu0 %1506
        %1524 = vmatprep.subr.bf16.mxu0 0
        %1525 = vmatpush1.bf16.msra.mxu0 %v1491
        %1526 = vmatprep.subr.bf16.mxu0 0
        %1527 = vmatpush1.bf16.msra.mxu0 %v1489
        %1528 = vmatprep.subr.bf16.mxu0 0
        %1529 = vmatpush1.bf16.msra.mxu0 %v1487
        %1530 = vmatprep.subr.bf16.mxu0 0
        %1531 = vmatpush1.bf16.msra.mxu0 %v1485
        %1532 = vmatprep.subr.bf16.mxu0 0
        %1533 = vmatpush1.bf16.msra.mxu0 %v1483
        %1534 = vmatprep.subr.bf16.mxu0 0
        %1535 = vmatpush1.bf16.msra.mxu0 %v1481
        %1536 = vmatprep.subr.bf16.mxu0 0
        %1537 = vmatpush1.bf16.msra.mxu0 %v1479
        %1538 = vmatprep.subr.bf16.mxu0 0
        %1539 = vmatpush1.bf16.msra.mxu0 %v1477
        %1540 = vmatprep.subr.bf16.mxu0 0
        %1541 = vmatpush2.bf16.msra.mxu0 %v1507
        %1542 = vmatprep.subr.bf16.mxu0 0
        %1543 = vmatpush2.bf16.msra.mxu0 %v1505
        %1544 = vmatprep.subr.bf16.mxu0 0
        %1545 = vmatpush2.bf16.msra.mxu0 %v1503
        %1546 = vmatprep.subr.bf16.mxu0 0
        %1547 = vmatpush2.bf16.msra.mxu0 %v1501
        %1548 = vmatprep.subr.bf16.mxu0 0
        %1549 = vmatpush2.bf16.msra.mxu0 %v1499
        %1550 = vmatprep.subr.bf16.mxu0 0
        %1551 = vmatpush2.bf16.msra.mxu0 %v1497
        %1552 = vmatprep.subr.bf16.mxu0 0
        %1553 = vmatpush2.bf16.msra.mxu0 %v1495
        %1554 = vmatprep.subr.bf16.mxu0 0
        %1555 = vmatpush2.bf16.msra.mxu0 %v1493
        %1556 = vmatprep.mubr.bf16.mxu0 %v1445
        %1557 = vmatmul.mubr.bf16.gmra.mxu0 %v1444
        %v1558 = vpop.f32.mrf.mxu0
        %v1559 = vadd.f32 0.0, %v1558
        %v1560 = vpop.f32.mrf.mxu0
        %v1561 = vpop.f32.mrf.mxu0
        %v1562 = vadd.f32 0.0, %v1561
        %v1563 = vpop.f32.mrf.mxu0
        %1564 = vmatprep.mubr.bf16.mxu0 %v1447
        %1565 = vmatmul.mubr.bf16.gmra.mxu0 %v1446
        %v1566 = vpop.f32.mrf.mxu0
        %v1567 = vadd.f32 0.0, %v1566
        %v1568 = vpop.f32.mrf.mxu0
        %v1569 = vpop.f32.mrf.mxu0
        %v1570 = vadd.f32 0.0, %v1569
        %v1571 = vpop.f32.mrf.mxu0
        %1572 = vmatprep.mubr.bf16.mxu0 %v1449
        %1573 = vmatmul.mubr.bf16.gmra.mxu0 %v1448
        %v1574 = vpop.f32.mrf.mxu0
        %v1575 = vadd.f32 0.0, %v1574
        %v1576 = vpop.f32.mrf.mxu0
        %v1577 = vpop.f32.mrf.mxu0
        %v1578 = vadd.f32 0.0, %v1577
        %v1579 = vpop.f32.mrf.mxu0
        %1580 = vmatprep.mubr.bf16.mxu0 %v1451
        %1581 = vmatmul.mubr.bf16.gmra.mxu0 %v1450
        %v1582 = vpop.f32.mrf.mxu0
        %v1583 = vadd.f32 0.0, %v1582
        %v1584 = vpop.f32.mrf.mxu0
        %v1585 = vpop.f32.mrf.mxu0
        %v1586 = vadd.f32 0.0, %v1585
        %v1587 = vpop.f32.mrf.mxu0
        %1588 = vmatprep.mubr.bf16.mxu0 %v1453
        %1589 = vmatmul.mubr.bf16.gmra.mxu0 %v1452
        %v1590 = vpop.f32.mrf.mxu0
        %v1591 = vadd.f32 0.0, %v1590
        %v1592 = vpop.f32.mrf.mxu0
        %v1593 = vpop.f32.mrf.mxu0
        %v1594 = vadd.f32 0.0, %v1593
        %v1595 = vpop.f32.mrf.mxu0
        %1596 = vmatprep.mubr.bf16.mxu0 %v1455
        %1597 = vmatmul.mubr.bf16.gmra.mxu0 %v1454
        %v1598 = vpop.f32.mrf.mxu0
        %v1599 = vadd.f32 0.0, %v1598
        %v1600 = vpop.f32.mrf.mxu0
        %v1601 = vpop.f32.mrf.mxu0
        %v1602 = vadd.f32 0.0, %v1601
        %v1603 = vpop.f32.mrf.mxu0
        %1604 = vmatprep.mubr.bf16.mxu0 %v1457
        %1605 = vmatmul.mubr.bf16.gmra.mxu0 %v1456
        %v1606 = vpop.f32.mrf.mxu0
        %v1607 = vadd.f32 0.0, %v1606
        %v1608 = vpop.f32.mrf.mxu0
        %v1609 = vpop.f32.mrf.mxu0
        %v1610 = vadd.f32 0.0, %v1609
        %v1611 = vpop.f32.mrf.mxu0
        %1612 = vmatprep.mubr.bf16.mxu0 %v1459
        %1613 = vmatmul.mubr.bf16.gmra.mxu0 %v1458
        %v1614 = vpop.f32.mrf.mxu0
        %v1615 = vadd.f32 0.0, %v1614
        %v1616 = vpop.f32.mrf.mxu0
        %v1617 = vpop.f32.mrf.mxu0
        %v1618 = vadd.f32 0.0, %v1617
        %v1619 = vpop.f32.mrf.mxu0
        %1620 = vdwg.mxu0
        %s1621 = sld [smem:[#allocation2]]
        %v1622 = vstv %s1621
        %v1623 = vmul.f32 %v1622, %v1559
        %v1624 = vmul.f32 %v1622, %v1562
        %v1625 = vmul.f32 %v1622, %v1567
        %v1626 = vmul.f32 %v1622, %v1570
        %v1627 = vmul.f32 %v1622, %v1575
        %v1628 = vmul.f32 %v1622, %v1578
        %v1629 = vmul.f32 %v1622, %v1583
        %v1630 = vmul.f32 %v1622, %v1586
        %v1631 = vmul.f32 %v1622, %v1591
        %v1632 = vmul.f32 %v1622, %v1594
        %v1633 = vmul.f32 %v1622, %v1599
        %v1634 = vmul.f32 %v1622, %v1602
        %v1635 = vmul.f32 %v1622, %v1607
        %v1636 = vmul.f32 %v1622, %v1610
        %v1637 = vmul.f32 %v1622, %v1615
        %v1638 = vmul.f32 %v1622, %v1618
        %v1639 = vadd.f32 %v1623, %v413
        %v1640 = vadd.f32 %v1624, %v414
        %v1641 = vadd.f32 %v1625, %v415
        %v1642 = vadd.f32 %v1626, %v416
        %v1643 = vadd.f32 %v1627, %v417
        %v1644 = vadd.f32 %v1628, %v418
        %v1645 = vadd.f32 %v1629, %v419
        %v1646 = vadd.f32 %v1630, %v420
        %v1647 = vadd.f32 %v1631, %v421
        %v1648 = vadd.f32 %v1632, %v422
        %v1649 = vadd.f32 %v1633, %v423
        %v1650 = vadd.f32 %v1634, %v424
        %v1651 = vadd.f32 %v1635, %v425
        %v1652 = vadd.f32 %v1636, %v426
        %v1653 = vadd.f32 %v1637, %v427
        %v1654 = vadd.f32 %v1638, %v428
        %1655 = vst.msk [vmem:[%s377] sm:$0xff] %vm438, %v1639
        %1656 = vst.msk [vmem:[%s377 + $0x8] sm:$0xff] %vm438, %v1640
        %1657 = vst.msk [vmem:[%s377 + $0x10] sm:$0xff] %vm438, %v1641
        %1658 = vst.msk [vmem:[%s377 + $0x18] sm:$0xff] %vm438, %v1642
        %1659 = vst.msk [vmem:[%s377 + $0x20] sm:$0xff] %vm438, %v1643
        %1660 = vst.msk [vmem:[%s377 + $0x28] sm:$0xff] %vm438, %v1644
        %1661 = vst.msk [vmem:[%s377 + $0x30] sm:$0xff] %vm438, %v1645
        %1662 = vst.msk [vmem:[%s377 + $0x38] sm:$0xff] %vm438, %v1646
        %1663 = vst.msk [vmem:[%s377 + $0x40] sm:$0xff] %vm438, %v1647
        %1664 = vst.msk [vmem:[%s377 + $0x48] sm:$0xff] %vm438, %v1648
        %1665 = vst.msk [vmem:[%s377 + $0x50] sm:$0xff] %vm438, %v1649
        %1666 = vst.msk [vmem:[%s377 + $0x58] sm:$0xff] %vm438, %v1650
        %1667 = vst.msk [vmem:[%s377 + $0x60] sm:$0xff] %vm438, %v1651
        %1668 = vst.msk [vmem:[%s377 + $0x68] sm:$0xff] %vm438, %v1652
        %1669 = vst.msk [vmem:[%s377 + $0x70] sm:$0xff] %vm438, %v1653
        %1670 = vst.msk [vmem:[%s377 + $0x78] sm:$0xff] %vm438, %v1654
        %s1671 = smul.u32 16, %s29
        %p1672 = scmp.lt.s32.totalorder %s28, 1
        %s1673 = scalar_select %p1672, %s28, 1
        %p1674 = scmp.lt.s32.totalorder %s1671, 31
        %s1675 = scalar_select %p1674, %s1671, 31
        %s1676 = smul.addr %s1673, 32
        %s1677 = sadd.s32 %s1675, %s1676
        %s1678 = smul.addr %s1677, 8
        %s1679 = scalar_lea.vmem %s7, %s1678
        %s1680 = sand.u32 %s233, 1
        %s1681 = scalar_lea.sflag [#allocation4], %s1680
        %s1682 = sand.u32 %s233, 1
        %s1683 = smul.addr %s1682, 256
        %s1684 = scalar_lea.vmem [#allocation3], %s1683
        // Predicated region
        $region49: #{tpu_custom_call.1} parent=47 // pred_check
          %p1685 = pneg %p215
        $region50: #{tpu_custom_call.1} parent=47 // pred_check_branch
          %1687 = sbr.rel (%p1685) target = $region52
        $region51: #{tpu_custom_call.1} parent=47 // pred_region
          %s1688 = smul.u32 16, %s29
        $region52: #{tpu_custom_call.1} parent=47 // pred_fallthru
          _
        // Predicated region
        $region53: #{tpu_custom_call.1} parent=47 // pred_check
          %p1689 = pneg %p243
        $region54: #{tpu_custom_call.1} parent=47 // pred_check_branch
          %1691 = sbr.rel (%p1689) target = $region56
        $region55: #{tpu_custom_call.1} parent=47 // pred_region
          %s1692 = smul.u32 16, %s29
          %s1694 = ssub.s32 4096, 4096
          %1695 = vsyncadd %s1681, %s1694
          %s1696 = smul.addr %s1692, 2
          %s1697 = smul.addr %s28, 64
          %s1698 = sadd.s32 %s1696, %s1697
          %s1699 = smul.addr %s1698, 128
          %s1700 = scalar_lea.hbm %s8, %s1699
          %s1701 = sshll.u32 %s1684, 4
          %s1702 = int_to_ptr.vmem [resolvable:$true] %s1701
          %1707 = dma.vmem_to_hbm [thread:$0]  %s1702, 4096, %s1700, %s1681, 256, 256, 16
        $region56: #{tpu_custom_call.1} parent=47 // pred_fallthru
          _
      $region48: #{tpu_custom_call.1} parent=5 // pred_fallthru
        _
      %p1708 = scmp.le.s32.totalorder 2, %s19
      // Predicated region
      $region57: #{tpu_custom_call.1} parent=5 // pred_check
        %p1709 = pneg %p1708
      $region58: #{tpu_custom_call.1} parent=5 // pred_check_branch
        %1711 = sbr.rel (%p1709) target = $region60
      $region59: #{tpu_custom_call.1} parent=5 // pred_region
        %s1712 = ssub.s32 %s19, 2
        // Predicated region
        $region61: #{tpu_custom_call.1} parent=59 // pred_check
          %p1713 = pneg %p221
        $region62: #{tpu_custom_call.1} parent=59 // pred_check_branch
          %1715 = sbr.rel (%p1713) target = $region64
        $region63: #{tpu_custom_call.1} parent=59 // pred_region
          %s1716 = smul.u32 16, %s31
          %p1717 = scmp.lt.s32.totalorder %s30, 1
          %s1718 = scalar_select %p1717, %s30, 1
          %p1719 = scmp.lt.s32.totalorder %s1716, 31
          %s1720 = scalar_select %p1719, %s1716, 31
          %s1721 = smul.addr %s1718, 32
          %s1722 = sadd.s32 %s1720, %s1721
          %s1723 = smul.addr %s1722, 8
          %s1724 = scalar_lea.vmem %s7, %s1723
        $region64: #{tpu_custom_call.1} parent=59 // pred_fallthru
          _
        // Predicated region
        $region65: #{tpu_custom_call.1} parent=59 // pred_check
          %p1725 = pneg %p249
        $region66: #{tpu_custom_call.1} parent=59 // pred_check_branch
          %1727 = sbr.rel (%p1725) target = $region68
        $region67: #{tpu_custom_call.1} parent=59 // pred_region
          %s1728 = sand.u32 %s234, 1
          %s1729 = scalar_lea.sflag [#allocation4], %s1728
          %s1730 = sand.u32 %s234, 1
          %s1731 = smul.addr %s1730, 256
          %s1732 = scalar_lea.vmem [#allocation3], %s1731
          %1733 = dma.done %s1729, 4096
        $region68: #{tpu_custom_call.1} parent=59 // pred_fallthru
          _
      $region60: #{tpu_custom_call.1} parent=5 // pred_fallthru
        _
    $region6: #{tpu_custom_call.1} parent=1 // loop_footer
      %s23 = sadd.s32 1, %s19
    $region7: #{tpu_custom_call.1} parent=1 // loop_footer_branch
      %18 = sbr.rel target = $region3
    $region8: #{tpu_custom_call.1} parent=1 // loop_exit
      _
    %1734 = vsyncpa [#allocation4], 1
    %s1735 = scalar_lea.sflag [#allocation4], 1
    %1736 = vsyncpa %s1735, 1

</llo_original>
